<compile_context>
chip_gen: v7x
topology: tpu7x:2x2x1
jax: 0.10.0
libtpu: 0.0.40
codegen_flags: <defaults>
</compile_context>

<pallas_src>
import jax
import jax.numpy as jnp
from jax.experimental import pallas as pl
from jax.experimental.pallas import tpu as pltpu


# ----------------------------- Pallas kernel -------------------------------

def _fused_head_kernel(x_ref, wg_ref, w1_ref, b1_ref, w23_ref, b23_ref,
                       o_ref, h_acc):
    """One grid step = (clip b, channel-chunk cc).

    x_ref  : (1, c_blk, T*HW)  clip feature slab chunk (compute dtype)
    wg_ref : (1, T*HW, R)      per-clip grouped pooling weights (compute dtype)
    w1_ref : (128, c_blk)      Learner W1 chunk, torch (out,in) layout, f32
    b1_ref : (128, 1)  w23_ref: (128, 1)  b23_ref: (1, 1)   (f32, resident)
    o_ref  : (1, 1, R)         sigmoid scores for all ROI columns of clip b
    h_acc  : (128, R) f32      scratch accumulator for h1_T across C chunks
    """
    cc = pl.program_id(1)

    @pl.when(cc == 0)
    def _():
        h_acc[...] = jnp.zeros_like(h_acc)

    # pooled_T[c, r] = sum_{t,p} x[c, t*HW+p] * wg[t*HW+p, r]
    # (temporal mean + RoIAlign + spatial mean, all folded into wg) — NN MXU.
    pooled_t = jnp.dot(x_ref[0], wg_ref[0],
                       preferred_element_type=jnp.float32)          # (c_blk, R)
    # First Learner layer, transposed: h1_T += W1[:, chunk] @ pooled_T — NN MXU.
    h_acc[...] += jnp.dot(w1_ref[...], pooled_t,
                          preferred_element_type=jnp.float32)       # (128, R)

    @pl.when(cc == pl.num_programs(1) - 1)
    def _():
        h1 = jnp.maximum(h_acc[...] + b1_ref[...], 0.0)   # ReLU; Dropout = id (eval)
        # Eval-mode fold of Linear(128,32)+Linear(32,1): 128->1 sublane reduce.
        logit = jnp.sum(h1 * w23_ref[...], axis=0, keepdims=True) + b23_ref[...]
        o_ref[0] = (1.0 / (1.0 + jnp.exp(-logit))).astype(o_ref.dtype)   # (1, R)


def _choose_c_block(c, thw, itemsize, budget_bytes=8 * 1024 * 1024):
    """Largest channel chunk whose double-buffered (c_blk, T*HW) slab fits the
    budget.  When splitting, c_blk must be a multiple of 128 (so the W1 block's
    last dim stays lane-aligned) and divide C; otherwise fall back to C."""
    max_cb = budget_bytes // max(1, 2 * thw * itemsize)
    if c <= max_cb:
        return c
    best = None
    for cb in range(128, int(max_cb) + 1, 128):
        if c % cb == 0:
            best = cb
    return best if best is not None else c


def fused_roi_head(feat, wg, w1, b1_col, w23_col, b23):
    """feat: (N, C, T*HW); wg: (N, T*HW, R); returns (N, R) sigmoid scores."""
    n, c, thw = feat.shape
    _, thw2, r = wg.shape
    assert thw == thw2
    h1dim = w1.shape[0]
    itemsize = jnp.dtype(feat.dtype).itemsize
    c_blk = _choose_c_block(c, thw, itemsize)
    grid = (n, c // c_blk)

    out = pl.pallas_call(
        _fused_head_kernel,
        out_shape=jax.ShapeDtypeStruct((n, 1, r), jnp.float32),
        grid_spec=pltpu.PrefetchScalarGridSpec(
            num_scalar_prefetch=0,
            grid=grid,
            in_specs=[
                pl.BlockSpec((1, c_blk, thw), lambda b, cc: (b, cc, 0)),   # x clip chunk
                pl.BlockSpec((1, thw, r),     lambda b, cc: (b, 0, 0)),    # grouped pool wts
                pl.BlockSpec((h1dim, c_blk),  lambda b, cc: (0, cc)),      # W1 chunk
                pl.BlockSpec((h1dim, 1),      lambda b, cc: (0, 0)),       # b1 (resident)
                pl.BlockSpec((h1dim, 1),      lambda b, cc: (0, 0)),       # folded w23
                pl.BlockSpec((1, 1),          lambda b, cc: (0, 0)),       # folded b23
            ],
            out_specs=pl.BlockSpec((1, 1, r), lambda b, cc: (b, 0, 0)),
            scratch_shapes=[pltpu.VMEM((h1dim, r), jnp.float32)],
        ),
        compiler_params=pltpu.CompilerParams(
            dimension_semantics=("parallel", "arbitrary"),   # clips on both TCs (v7x)
            vmem_limit_bytes=32 * 1024 * 1024),
    )(feat, wg, w1, b1_col, w23_col, b23)
    return out.reshape(n, r)


# ------------------------------- JAX glue ----------------------------------

def roi_pool_weights(bbox, h, w, out_size, spatial_scale, dtype=jnp.float32):
    """Dense per-ROI weights over the HxW feature map implementing aligned
    RoIAlign(out_size x out_size, 1 bilinear sample per bin, border-clamped)
    followed by the mean over all bins.  Returns (R, H*W); tiny, stays in XLA.
    """
    # TODO(synk): mmcv RoIAlign's adaptive sampling_ratio / out-of-bound
    # zeroing is not reproduced; this is aligned=True, 1 sample/bin, clamped.
    s = out_size * out_size

    def one_roi(roi):
        x1 = roi[1] * spatial_scale - 0.5
        y1 = roi[2] * spatial_scale - 0.5
        x2 = roi[3] * spatial_scale - 0.5
        y2 = roi[4] * spatial_scale - 0.5
        bin_w = (x2 - x1) / out_size
        bin_h = (y2 - y1) / out_size
        jj = jnp.arange(out_size, dtype=dtype)
        xs = x1 + (jj + 0.5) * bin_w
        ys = y1 + (jj + 0.5) * bin_h
        ys_g, xs_g = jnp.meshgrid(ys, xs, indexing="ij")
        ys_f = ys_g.reshape(-1)
        xs_f = xs_g.reshape(-1)
        y0 = jnp.floor(ys_f)
        x0 = jnp.floor(xs_f)
        ly = ys_f - y0
        lx = xs_f - x0
        hy = 1.0 - ly
        hx = 1.0 - lx

        wgt = jnp.zeros((h, w), dtype)

        def scatter(wg, yi, xi, wv):
            yc = jnp.clip(yi, 0, h - 1).astype(jnp.int32)
            xc = jnp.clip(xi, 0, w - 1).astype(jnp.int32)
            return wg.at[yc, xc].add(wv)

        wgt = scatter(wgt, y0, x0, hy * hx)
        wgt = scatter(wgt, y0, x0 + 1.0, hy * lx)
        wgt = scatter(wgt, y0 + 1.0, x0, ly * hx)
        wgt = scatter(wgt, y0 + 1.0, x0 + 1.0, ly * lx)
        return (wgt * (1.0 / s)).reshape(h * w)

    return jax.vmap(one_roi)(bbox.astype(dtype))


def init_learner_params(key, input_dim):
    """Deterministic init matching Learner.__init__ shapes, stored in torch's
    native (out, in) layout so real weights can be dropped in directly.
    Weights: xavier_normal_; biases: torch Linear default uniform."""
    k1, k2, k3, kb1, kb2, kb3 = jax.random.split(key, 6)

    def xavier(k, fan_out, fan_in):
        std = (2.0 / (fan_in + fan_out)) ** 0.5
        return jax.random.normal(k, (fan_out, fan_in), jnp.float32) * std

    def bias(k, fan_out, fan_in):
        bound = 1.0 / (fan_in ** 0.5)
        return jax.random.uniform(k, (fan_out,), jnp.float32, -bound, bound)

    w1 = xavier(k1, 128, input_dim); b1 = bias(kb1, 128, input_dim)
    w2 = xavier(k2, 32, 128);        b2 = bias(kb2, 32, 128)
    w3 = xavier(k3, 1, 32);          b3 = bias(kb3, 1, 32)
    return (w1, b1, w2, b2, w3, b3)


def violence_detector_regression(x, bbox, num_tubes, params,
                                 roi_out=8, spatial_scale=1.0 / 16.0,
                                 aggregate=False, compute_dtype=jnp.bfloat16):
    """Forward pass of ViolenceDetectorRegression (eval mode).

    x: (N, C, T, H, W) features; bbox: (R, 5) = [batch_idx, x1, y1, x2, y2]
    in image pixels.  Returns (R, 1) scores, or (batch,) if aggregate.
    """
    n, c, t, h, w = x.shape
    hw = h * w
    thw = t * hw
    r = bbox.shape[0]
    assert bbox.shape[1] == 5
    batch = n // num_tubes

    # TODO(synk): BackboneI3D (pretrained I3D trunk) source was not provided;
    # using an identity feature extractor in its place.
    feat = x.reshape(n, c, thw).astype(compute_dtype)      # lane-dense clip slabs

    # Per-ROI RoIAlign + spatial-mean weights over the HxW map (1/bins folded).
    wpool = roi_pool_weights(bbox, h, w, roi_out, spatial_scale)     # (R, HW) f32
    bidx = bbox[:, 0].astype(jnp.int32)

    # Group per clip and fuse the temporal mean: wg[b, t*HW+p, r] is
    # wpool[r, p] / T if bidx[r] == b else 0.  Off-clip ROI columns compute a
    # bias-only score that is discarded by the final per-ROI selection.
    onehot = (bidx[None, :] == jnp.arange(n, dtype=jnp.int32)[:, None])
    wg_clip = onehot.astype(jnp.float32)[:, None, :] * wpool.T[None, :, :]  # (N,HW,R)
    wg = (jnp.tile(wg_clip, (1, t, 1)) * (1.0 / t)).astype(compute_dtype)   # (N,T*HW,R)

    # Eval-mode fold (done in f32): no nonlinearity between Linear(128,32) and
    # Linear(32,1) and dropout is identity, so fold into one 128->1 projection.
    w1, b1, w2, b2, w3, b3 = params
    w23_col = (w3 @ w2).reshape(-1, 1).astype(jnp.float32)            # (128, 1)
    b23 = (w3 @ b2.reshape(-1, 1) + b3.reshape(1, 1)).astype(jnp.float32)  # (1, 1)
    b1_col = b1.reshape(-1, 1).astype(jnp.float32)                    # (128, 1)
    w1f = w1.astype(jnp.float32)                                      # (128, C)

    scores_nr = fused_roi_head(feat, wg, w1f, b1_col, w23_col, b23)   # (N, R)
    out = scores_nr[bidx, jnp.arange(r)].reshape(r, 1)                # (R, 1)

    if aggregate:
        out = out.reshape(batch, num_tubes).max(axis=1)
    return out


# --------------------------------- main -------------------------------------

if __name__ == "__main__":
    key = jax.random.PRNGKey(0)
    kx, kb, kp = jax.random.split(key, 3)

    batch, num_tubes = 2, 2
    N = batch * num_tubes                  # clips = batch * num_tubes
    C, T, H, W = 16, 4, 16, 16             # feature channels / time / spatial

    x = jax.random.normal(kx, (N, C, T, H, W), jnp.float32)

    # One RoI per clip: (batch_idx, x1, y1, x2, y2) in image-pixel coords
    # (stride-16 feature map -> image size 256).
    ridx = jnp.arange(N, dtype=jnp.float32)[:, None]
    boxes = jnp.stack([jnp.full((N,), 32.0), jnp.full((N,), 32.0),
                       jnp.full((N,), 224.0), jnp.full((N,), 224.0)], axis=1)
    boxes = boxes + jax.random.uniform(kb, boxes.shape, jnp.float32, 0.0, 8.0)
    bbox = jnp.concatenate([ridx, boxes], axis=1)                 # (N, 5)

    params = init_learner_params(kp, input_dim=C)                 # fc_input_dim == C

    out = violence_detector_regression(x, bbox, num_tubes, params)
    jax.block_until_ready(out)
    assert out.shape == (N, 1)
    print("KERNEL_OK")
</pallas_src>

<mosaic_0001>
module attributes {stable_mosaic.version = 11 : i64} {
  func.func @_fused_head_kernel(%arg0: i32, %arg1: i32, %arg2: memref<1x16x1024xbf16, #tpu.memory_space<vmem>>, %arg3: memref<1x1024x4xbf16, #tpu.memory_space<vmem>>, %arg4: memref<128x16xf32, #tpu.memory_space<vmem>>, %arg5: memref<128x1xf32, #tpu.memory_space<vmem>>, %arg6: memref<128x1xf32, #tpu.memory_space<vmem>>, %arg7: memref<1x1xf32, #tpu.memory_space<vmem>>, %arg8: memref<1x1x4xf32, #tpu.memory_space<vmem>>, %arg9: memref<128x4xf32, #tpu.memory_space<vmem>>) attributes {dimension_semantics = [#tpu.dimension_semantics<parallel>, #tpu.dimension_semantics<arbitrary>], iteration_bounds = array<i64: 4, 1>, scalar_prefetch = 0 : i64, scratch_operands = 1 : i64, tpu.core_type = #tpu.core_type<tc>, window_params = [{transform_indices = @transform_0, window_bounds = array<i64: 1, 16, 1024>}, {transform_indices = @transform_1, window_bounds = array<i64: 1, 1024, 4>}, {transform_indices = @transform_2, window_bounds = array<i64: 128, 16>}, {pipeline_mode = #tpu.pipeline_mode<synchronous>, transform_indices = @transform_3, window_bounds = array<i64: 128, 1>}, {pipeline_mode = #tpu.pipeline_mode<synchronous>, transform_indices = @transform_4, window_bounds = array<i64: 128, 1>}, {pipeline_mode = #tpu.pipeline_mode<synchronous>, transform_indices = @transform_5, window_bounds = array<i64: 1, 1>}, {transform_indices = @transform_6, window_bounds = array<i64: 1, 1, 4>}]} {
    %c0_i32 = arith.constant 0 : i32
    %0 = arith.cmpi eq, %arg1, %c0_i32 : i32
    %1 = arith.extui %0 : i1 to i32
    %c0_i32_0 = arith.constant 0 : i32
    %2 = arith.cmpi ne, %1, %c0_i32_0 : i32
    scf.if %2 {
      %cst_15 = arith.constant 0.000000e+00 : f32
      %16 = vector.broadcast %cst_15 : f32 to vector<128x4xf32>
      %c0_16 = arith.constant 0 : index
      %c0_17 = arith.constant 0 : index
      %17 = vector.load %arg9[%c0_16, %c0_17] : memref<128x4xf32, #tpu.memory_space<vmem>>, vector<128x4xf32>
      tpu.vector_store %arg9[%c0_16, %c0_17], %16 {strides = array<i32>} : memref<128x4xf32, #tpu.memory_space<vmem>>, vector<128x4xf32>,
    } else {
    }
    %c0 = arith.constant 0 : index
    %c0_1 = arith.constant 0 : index
    %c0_2 = arith.constant 0 : index
    %3 = vector.load %arg2[%c0, %c0_1, %c0_2] : memref<1x16x1024xbf16, #tpu.memory_space<vmem>>, vector<1x16x1024xbf16>
    %4 = vector.shape_cast %3 : vector<1x16x1024xbf16> to vector<16x1024xbf16>
    %c0_3 = arith.constant 0 : index
    %c0_4 = arith.constant 0 : index
    %c0_5 = arith.constant 0 : index
    %5 = vector.load %arg3[%c0_3, %c0_4, %c0_5] : memref<1x1024x4xbf16, #tpu.memory_space<vmem>>, vector<1x1024x4xbf16>
    %6 = vector.shape_cast %5 : vector<1x1024x4xbf16> to vector<1024x4xbf16>
    %cst = arith.constant dense<0.000000e+00> : vector<16x4xf32>
    %7 = tpu.matmul %4, %6, %cst {dimension_numbers = #tpu.dot_dimension_numbers<[1], [0], [0], [1], [0, 0, 1, 1], [], []>} : vector<16x1024xbf16>, vector<1024x4xbf16>, vector<16x4xf32> -> vector<16x4xf32>
    %c0_6 = arith.constant 0 : index
    %c0_7 = arith.constant 0 : index
    %8 = vector.load %arg9[%c0_6, %c0_7] : memref<128x4xf32, #tpu.memory_space<vmem>>, vector<128x4xf32>
    %c0_8 = arith.constant 0 : index
    %c0_9 = arith.constant 0 : index
    %9 = vector.load %arg4[%c0_8, %c0_9] : memref<128x16xf32, #tpu.memory_space<vmem>>, vector<128x16xf32>
    %cst_10 = arith.constant dense<0.000000e+00> : vector<128x4xf32>
    %10 = tpu.matmul %9, %7, %cst_10 {dimension_numbers = #tpu.dot_dimension_numbers<[1], [0], [0], [1], [0, 0, 1, 1], [], []>} : vector<128x16xf32>, vector<16x4xf32>, vector<128x4xf32> -> vector<128x4xf32>
    %11 = arith.addf %8, %10 : vector<128x4xf32>
    %c0_11 = arith.constant 0 : index
    %c0_12 = arith.constant 0 : index
    %12 = vector.load %arg9[%c0_11, %c0_12] : memref<128x4xf32, #tpu.memory_space<vmem>>, vector<128x4xf32>
    tpu.vector_store %arg9[%c0_11, %c0_12], %11 {strides = array<i32>} : memref<128x4xf32, #tpu.memory_space<vmem>>, vector<128x4xf32>,
    %c0_i32_13 = arith.constant 0 : i32
    %13 = arith.cmpi eq, %arg1, %c0_i32_13 : i32
    %14 = arith.extui %13 : i1 to i32
    %c0_i32_14 = arith.constant 0 : i32
    %15 = arith.cmpi ne, %14, %c0_i32_14 : i32
    scf.if %15 {
      %c0_15 = arith.constant 0 : index
      %c0_16 = arith.constant 0 : index
      %16 = vector.load %arg9[%c0_15, %c0_16] : memref<128x4xf32, #tpu.memory_space<vmem>>, vector<128x4xf32>
      %c0_17 = arith.constant 0 : index
      %c0_18 = arith.constant 0 : index
      %17 = vector.load %arg5[%c0_17, %c0_18] : memref<128x1xf32, #tpu.memory_space<vmem>>, vector<128x1xf32>
      %18 = vector.broadcast %17 : vector<128x1xf32> to vector<128x4xf32>
      %19 = arith.addf %16, %18 : vector<128x4xf32>
      %cst_19 = arith.constant 0.000000e+00 : f32
      %20 = vector.broadcast %cst_19 : f32 to vector<128x4xf32>
      %21 = arith.maximumf %19, %20 : vector<128x4xf32>
      %c0_20 = arith.constant 0 : index
      %c0_21 = arith.constant 0 : index
      %22 = vector.load %arg6[%c0_20, %c0_21] : memref<128x1xf32, #tpu.memory_space<vmem>>, vector<128x1xf32>
      %23 = vector.broadcast %22 : vector<128x1xf32> to vector<128x4xf32>
      %24 = arith.mulf %21, %23 : vector<128x4xf32>
      %cst_22 = arith.constant dense<0.000000e+00> : vector<4xf32>
      %25 = vector.multi_reduction <add>, %24, %cst_22 [0] : vector<128x4xf32> to vector<4xf32>
      %26 = vector.shape_cast %25 : vector<4xf32> to vector<1x4xf32>
      %c0_23 = arith.constant 0 : index
      %c0_24 = arith.constant 0 : index
      %27 = vector.load %arg7[%c0_23, %c0_24] : memref<1x1xf32, #tpu.memory_space<vmem>>, vector<1x1xf32>
      %28 = vector.broadcast %27 : vector<1x1xf32> to vector<1x4xf32>
      %29 = arith.addf %26, %28 : vector<1x4xf32>
      %cst_25 = arith.constant 0.000000e+00 : f32
      %30 = vector.broadcast %cst_25 : f32 to vector<1x4xf32>
      %31 = arith.subf %30, %29 : vector<1x4xf32>
      %32 = math.exp %31 : vector<1x4xf32>
      %cst_26 = arith.constant 1.000000e+00 : f32
      %33 = vector.broadcast %cst_26 : f32 to vector<1x4xf32>
      %34 = arith.addf %33, %32 : vector<1x4xf32>
      %cst_27 = arith.constant 1.000000e+00 : f32
      %35 = vector.broadcast %cst_27 : f32 to vector<1x4xf32>
      %36 = arith.divf %35, %34 : vector<1x4xf32>
      %c0_28 = arith.constant 0 : index
      %c0_29 = arith.constant 0 : index
      %c0_30 = arith.constant 0 : index
      %37 = vector.load %arg8[%c0_28, %c0_29, %c0_30] : memref<1x1x4xf32, #tpu.memory_space<vmem>>, vector<1x1x4xf32>
      %38 = vector.shape_cast %37 : vector<1x1x4xf32> to vector<1x4xf32>
      %39 = vector.shape_cast %36 : vector<1x4xf32> to vector<1x1x4xf32>
      tpu.vector_store %arg8[%c0_28, %c0_29, %c0_30], %39 {strides = array<i32>} : memref<1x1x4xf32, #tpu.memory_space<vmem>>, vector<1x1x4xf32>,
    } else {
    }
    return
  }
  func.func @transform_0(%arg0: i32, %arg1: i32) -> (i32, i32, i32) {
    %c0_i32 = arith.constant 0 : i32
    %c0_i32_0 = arith.constant 0 : i32
    return %arg0, %arg1, %c0_i32 : i32, i32, i32
  }
  func.func @transform_1(%arg0: i32, %arg1: i32) -> (i32, i32, i32) {
    %c0_i32 = arith.constant 0 : i32
    %c0_i32_0 = arith.constant 0 : i32
    %c0_i32_1 = arith.constant 0 : i32
    return %arg0, %c0_i32, %c0_i32_0 : i32, i32, i32
  }
  func.func @transform_2(%arg0: i32, %arg1: i32) -> (i32, i32) {
    %c0_i32 = arith.constant 0 : i32
    %c0_i32_0 = arith.constant 0 : i32
    return %c0_i32, %arg1 : i32, i32
  }
  func.func @transform_3(%arg0: i32, %arg1: i32) -> (i32, i32) {
    %c0_i32 = arith.constant 0 : i32
    %c0_i32_0 = arith.constant 0 : i32
    %c0_i32_1 = arith.constant 0 : i32
    return %c0_i32, %c0_i32_0 : i32, i32
  }
  func.func @transform_4(%arg0: i32, %arg1: i32) -> (i32, i32) {
    %c0_i32 = arith.constant 0 : i32
    %c0_i32_0 = arith.constant 0 : i32
    %c0_i32_1 = arith.constant 0 : i32
    return %c0_i32, %c0_i32_0 : i32, i32
  }
  func.func @transform_5(%arg0: i32, %arg1: i32) -> (i32, i32) {
    %c0_i32 = arith.constant 0 : i32
    %c0_i32_0 = arith.constant 0 : i32
    %c0_i32_1 = arith.constant 0 : i32
    return %c0_i32, %c0_i32_0 : i32, i32
  }
  func.func @transform_6(%arg0: i32, %arg1: i32) -> (i32, i32, i32) {
    %c0_i32 = arith.constant 0 : i32
    %c0_i32_0 = arith.constant 0 : i32
    %c0_i32_1 = arith.constant 0 : i32
    return %arg0, %c0_i32, %c0_i32_0 : i32, i32, i32
  }
}

</mosaic_0001>

<llo_original>
// kernel: tpu_custom_call.1
$region0: #{tpu_custom_call.1}
  #allocation0 [shape = 'u32[]', space=smem, size = 0x4, offset = 0x4, fixed_abs, tag = 'smem constant byte address 0x4 - core index']
  #allocation1 [shape = 'u32[144,128]{1,0:T(1,128)}', space=vmem, size = 0x12000, scoped, tag = 'internal scratch']
  #allocation2 [shape = 'f32[128,4]{1,0:T(8,128)}', space=vmem, size = 0x10000, scoped, tag = 'scratch operand']
  #allocation3 [shape = 'f32[1,1]{1,0:T(1,128)S(1)}', space=vmem, size = 0x200, scoped, tag = 'scoped memory for tpu_custom_call.1']
  %s0 = inlined_call_operand.vmem [shape: bf16[4,16,1024], index: 0, kind: input, shape index: {}]
  %s1 = inlined_call_operand.vmem [shape: bf16[4,1024,4], index: 1, kind: input, shape index: {}]
  %s2 = inlined_call_operand.vmem [shape: f32[128,16], index: 2, kind: input, shape index: {}]
  %s3 = inlined_call_operand.vmem [shape: f32[128,1], index: 3, kind: input, shape index: {}]
  %s4 = inlined_call_operand.vmem [shape: f32[128,1], index: 4, kind: input, shape index: {}]
  %s5 = inlined_call_operand.<no memory space> [shape: f32[1,1], index: 5, kind: input, shape index: {}]
  %s6 = inlined_call_operand.hbm [shape: f32[4,1,4], index: 6, kind: output, shape index: {}]
  %s7 = sld [smem:[#allocation0]]
  $region65: #{tpu_custom_call.1} parent=0
    _
  %s9 = ssub.s32 1, %s7
  %s10 = scalar_select 0, %s9, %s7
  %v11 = vstv %s5
  %12 = vst [vmem:[#allocation3] sm:$0x1] %v11
  $region1: #{tpu_custom_call.1} parent=0
    #allocation4 [shape = 'u8[1024]{0}', space=vmem, size = 0x400, scoped, tag = 'output window, operand 0']
    #allocation5 [shape = 's32[2]{0}', space=sflag, size = 0x8, scoped, tag = 'scoped memory for tpu_custom_call.1']
    %13 = vsyncpa [#allocation5], 0
    %s14 = scalar_lea.sflag [#allocation5], 1
    %15 = vsyncpa %s14, 0
    loop: start=0, step=1, limit=6
    $region2: #{tpu_custom_call.1} parent=1 // loop_pre_header
      _
    $region3: #{tpu_custom_call.1} parent=1 // loop_header
      %s17 = sphi 0, %s21
      %p18 = scmp.ge.s32.totalorder %s17, 6
      %s24 = sphi 0, %s36
      %s25 = sphi 0, %s32
      %s26 = sphi 0, %s24
      %s27 = sphi 0, %s25
      %s28 = sphi 0, %s26
      %s29 = sphi 0, %s27
      %s41 = sphi 0, %s43
      %s44 = sphi 0, %s41
      %s45 = sphi 0, %s44
      %s61 = sphi 0, %s45
      %s67 = sphi 0, %s69
      %s70 = sphi 0, %s67
      %s71 = sphi 0, %s70
      %s87 = sphi 0, %s71
      %s93 = sphi 0, %s95
      %s96 = sphi 0, %s93
      %s97 = sphi 0, %s96
      %s113 = sphi 0, %s97
      %s117 = sphi 0, %s117
      %s119 = sphi 0, %s117
      %s120 = sphi 0, %s119
      %s134 = sphi 0, %s120
      %s138 = sphi 0, %s138
      %s140 = sphi 0, %s138
      %s141 = sphi 0, %s140
      %s155 = sphi 0, %s141
      %s159 = sphi 0, %s159
      %s161 = sphi 0, %s159
      %s162 = sphi 0, %s161
      %s176 = sphi 0, %s162
      %s182 = sphi 0, %s184
      %s185 = sphi 0, %s182
      %s186 = sphi 0, %s185
      %s202 = sphi 0, %s186
    $region4: #{tpu_custom_call.1} parent=1 // loop_header_branch
      %20 = sbr.rel (%p18) target = $region8
    $region5: #{tpu_custom_call.1} parent=1 // loop_body
      %s22 = ssub.s32 %s17, 1
      %s23 = ssub.s32 %s17, 2
      %s30 = sadd.s32 1, %s25
      %p31 = scmp.ge.s32.totalorder %s30, 1
      %s32 = scalar_select %p31, 0, %s30
      %s33 = sadd.s32 1, %s24
      %s34 = scalar_select %p31, %s33, %s24
      %p35 = scmp.ge.s32.totalorder %s34, 4
      %s36 = scalar_select %p35, 0, %s34
      %s37 = ssub.s32 %s24, %s36
      %s38 = ssub.s32 %s25, %s32
      %s39 = sor.u32 %s37, %s38
      %p40 = scmp.eq.s32.totalorder %s39, 0
      %s42 = sadd.s32 %s41, 1
      %s43 = scalar_select %p40, %s41, %s42
      %p46 = pneg %p40
      %p47 = scmp.eq.s32.totalorder %s17, 3
      %p48 = por %p46, %p47
      %p49 = scmp.ne.s32.totalorder %s41, %s44
      %p50 = scmp.eq.s32.totalorder %s17, 0
      %p51 = por %p49, %p50
      %p52 = scmp.ne.s32.totalorder %s41, %s44
      %p53 = scmp.eq.s32.totalorder %s22, 3
      %p54 = por %p52, %p53
      %p55 = scmp.ne.s32.totalorder %s44, %s45
      %p56 = scmp.eq.s32.totalorder %s22, 0
      %p57 = por %p55, %p56
      %p58 = scmp.ne.s32.totalorder %s44, %s45
      %p59 = scmp.eq.s32.totalorder %s23, 3
      %p60 = por %p58, %p59
      %p62 = scmp.ne.s32.totalorder %s45, %s61
      %p63 = scmp.eq.s32.totalorder %s23, 0
      %p64 = por %p62, %p63
      %s65 = ssub.s32 %s24, %s36
      %p66 = scmp.eq.s32.totalorder %s65, 0
      %s68 = sadd.s32 %s67, 1
      %s69 = scalar_select %p66, %s67, %s68
      %p72 = pneg %p66
      %p73 = scmp.eq.s32.totalorder %s17, 3
      %p74 = por %p72, %p73
      %p75 = scmp.ne.s32.totalorder %s67, %s70
      %p76 = scmp.eq.s32.totalorder %s17, 0
      %p77 = por %p75, %p76
      %p78 = scmp.ne.s32.totalorder %s67, %s70
      %p79 = scmp.eq.s32.totalorder %s22, 3
      %p80 = por %p78, %p79
      %p81 = scmp.ne.s32.totalorder %s70, %s71
      %p82 = scmp.eq.s32.totalorder %s22, 0
      %p83 = por %p81, %p82
      %p84 = scmp.ne.s32.totalorder %s70, %s71
      %p85 = scmp.eq.s32.totalorder %s23, 3
      %p86 = por %p84, %p85
      %p88 = scmp.ne.s32.totalorder %s71, %s87
      %p89 = scmp.eq.s32.totalorder %s23, 0
      %p90 = por %p88, %p89
      %s91 = ssub.s32 %s25, %s32
      %p92 = scmp.eq.s32.totalorder %s91, 0
      %s94 = sadd.s32 %s93, 1
      %s95 = scalar_select %p92, %s93, %s94
      %p98 = pneg %p92
      %p99 = scmp.eq.s32.totalorder %s17, 3
      %p100 = por %p98, %p99
      %p101 = scmp.ne.s32.totalorder %s93, %s96
      %p102 = scmp.eq.s32.totalorder %s17, 0
      %p103 = por %p101, %p102
      %p104 = scmp.ne.s32.totalorder %s93, %s96
      %p105 = scmp.eq.s32.totalorder %s22, 3
      %p106 = por %p104, %p105
      %p107 = scmp.ne.s32.totalorder %s96, %s97
      %p108 = scmp.eq.s32.totalorder %s22, 0
      %p109 = por %p107, %p108
      %p110 = scmp.ne.s32.totalorder %s96, %s97
      %p111 = scmp.eq.s32.totalorder %s23, 3
      %p112 = por %p110, %p111
      %p114 = scmp.ne.s32.totalorder %s97, %s113
      %p115 = scmp.eq.s32.totalorder %s23, 0
      %p116 = por %p114, %p115
      %s118 = sadd.s32 %s117, 1
      %p121 = scmp.eq.s32.totalorder %s17, 3
      %p122 = scmp.ne.s32.totalorder %s117, %s119
      %p123 = scmp.eq.s32.totalorder %s17, 0
      %p124 = por %p122, %p123
      %p125 = scmp.ne.s32.totalorder %s117, %s119
      %p126 = scmp.eq.s32.totalorder %s22, 3
      %p127 = por %p125, %p126
      %p128 = scmp.ne.s32.totalorder %s119, %s120
      %p129 = scmp.eq.s32.totalorder %s22, 0
      %p130 = por %p128, %p129
      %p131 = scmp.ne.s32.totalorder %s119, %s120
      %p132 = scmp.eq.s32.totalorder %s23, 3
      %p133 = por %p131, %p132
      %p135 = scmp.ne.s32.totalorder %s120, %s134
      %p136 = scmp.eq.s32.totalorder %s23, 0
      %p137 = por %p135, %p136
      %s139 = sadd.s32 %s138, 1
      %p142 = scmp.eq.s32.totalorder %s17, 3
      %p143 = scmp.ne.s32.totalorder %s138, %s140
      %p144 = scmp.eq.s32.totalorder %s17, 0
      %p145 = por %p143, %p144
      %p146 = scmp.ne.s32.totalorder %s138, %s140
      %p147 = scmp.eq.s32.totalorder %s22, 3
      %p148 = por %p146, %p147
      %p149 = scmp.ne.s32.totalorder %s140, %s141
      %p150 = scmp.eq.s32.totalorder %s22, 0
      %p151 = por %p149, %p150
      %p152 = scmp.ne.s32.totalorder %s140, %s141
      %p153 = scmp.eq.s32.totalorder %s23, 3
      %p154 = por %p152, %p153
      %p156 = scmp.ne.s32.totalorder %s141, %s155
      %p157 = scmp.eq.s32.totalorder %s23, 0
      %p158 = por %p156, %p157
      %s160 = sadd.s32 %s159, 1
      %p163 = scmp.eq.s32.totalorder %s17, 3
      %p164 = scmp.ne.s32.totalorder %s159, %s161
      %p165 = scmp.eq.s32.totalorder %s17, 0
      %p166 = por %p164, %p165
      %p167 = scmp.ne.s32.totalorder %s159, %s161
      %p168 = scmp.eq.s32.totalorder %s22, 3
      %p169 = por %p167, %p168
      %p170 = scmp.ne.s32.totalorder %s161, %s162
      %p171 = scmp.eq.s32.totalorder %s22, 0
      %p172 = por %p170, %p171
      %p173 = scmp.ne.s32.totalorder %s161, %s162
      %p174 = scmp.eq.s32.totalorder %s23, 3
      %p175 = por %p173, %p174
      %p177 = scmp.ne.s32.totalorder %s162, %s176
      %p178 = scmp.eq.s32.totalorder %s23, 0
      %p179 = por %p177, %p178
      %s180 = ssub.s32 %s24, %s36
      %p181 = scmp.eq.s32.totalorder %s180, 0
      %s183 = sadd.s32 %s182, 1
      %s184 = scalar_select %p181, %s182, %s183
      %p187 = pneg %p181
      %p188 = scmp.eq.s32.totalorder %s17, 3
      %p189 = por %p187, %p188
      %p190 = scmp.ne.s32.totalorder %s182, %s185
      %p191 = scmp.eq.s32.totalorder %s17, 0
      %p192 = por %p190, %p191
      %p193 = scmp.ne.s32.totalorder %s182, %s185
      %p194 = scmp.eq.s32.totalorder %s22, 3
      %p195 = por %p193, %p194
      %p196 = scmp.ne.s32.totalorder %s185, %s186
      %p197 = scmp.eq.s32.totalorder %s22, 0
      %p198 = por %p196, %p197
      %p199 = scmp.ne.s32.totalorder %s185, %s186
      %p200 = scmp.eq.s32.totalorder %s23, 3
      %p201 = por %p199, %p200
      %p203 = scmp.ne.s32.totalorder %s186, %s202
      %p204 = scmp.eq.s32.totalorder %s23, 0
      %p205 = por %p203, %p204
      %p206 = scmp.le.s32.totalorder 1, %s17
      %p207 = scmp.lt.s32.totalorder %s17, 5
      %p208 = pnand %p206, %p207
      %p209 = pneg %p208
      // Predicated region
      $region9: #{tpu_custom_call.1} parent=5 // pred_check
        _
      $region10: #{tpu_custom_call.1} parent=5 // pred_check_branch
        %211 = sbr.rel (%p208) target = $region12
      $region11: #{tpu_custom_call.1} parent=5 // pred_region
        %s212 = ssub.s32 %s17, 1
        // Predicated region
        $region13: #{tpu_custom_call.1} parent=11 // pred_check
          %p213 = pneg %p109
        $region14: #{tpu_custom_call.1} parent=11 // pred_check_branch
          %215 = sbr.rel (%p213) target = $region16
        $region15: #{tpu_custom_call.1} parent=11 // pred_region
          %p216 = scmp.lt.s32.totalorder %s27, 0
          %s217 = scalar_select %p216, %s27, 0
          %s218 = smul.addr %s217, 8
          %s219 = scalar_lea.vmem %s2, %s218
        $region16: #{tpu_custom_call.1} parent=11 // pred_fallthru
          _
        // Predicated region
        $region17: #{tpu_custom_call.1} parent=11 // pred_check
          %p220 = pneg %p130
        $region18: #{tpu_custom_call.1} parent=11 // pred_check_branch
          %222 = sbr.rel (%p220) target = $region20
        $region19: #{tpu_custom_call.1} parent=11 // pred_region
          _
        $region20: #{tpu_custom_call.1} parent=11 // pred_fallthru
          _
        // Predicated region
        $region21: #{tpu_custom_call.1} parent=11 // pred_check
          %p223 = pneg %p151
        $region22: #{tpu_custom_call.1} parent=11 // pred_check_branch
          %225 = sbr.rel (%p223) target = $region24
        $region23: #{tpu_custom_call.1} parent=11 // pred_region
          _
        $region24: #{tpu_custom_call.1} parent=11 // pred_fallthru
          _
        // Predicated region
        $region25: #{tpu_custom_call.1} parent=11 // pred_check
          %p226 = pneg %p172
        $region26: #{tpu_custom_call.1} parent=11 // pred_check_branch
          %228 = sbr.rel (%p226) target = $region28
        $region27: #{tpu_custom_call.1} parent=11 // pred_region
          _
        $region28: #{tpu_custom_call.1} parent=11 // pred_fallthru
          _
      $region12: #{tpu_custom_call.1} parent=5 // pred_fallthru
        _
      %p229 = scmp.lt.s32.totalorder %s17, 4
      // Predicated region
      $region29: #{tpu_custom_call.1} parent=5 // pred_check
        %p230 = pneg %p229
      $region30: #{tpu_custom_call.1} parent=5 // pred_check_branch
        %232 = sbr.rel (%p230) target = $region32
      $region31: #{tpu_custom_call.1} parent=5 // pred_region
        // Predicated region
        $region33: #{tpu_custom_call.1} parent=31 // pred_check
          %p233 = pneg %p51
        $region34: #{tpu_custom_call.1} parent=31 // pred_check_branch
          %235 = sbr.rel (%p233) target = $region36
        $region35: #{tpu_custom_call.1} parent=31 // pred_region
          %s236 = smul.u32 2, %s25
          %p237 = scmp.lt.s32.totalorder %s24, 3
          %s238 = scalar_select %p237, %s24, 3
          %p239 = scmp.lt.s32.totalorder %s236, 1
          %s240 = scalar_select %p239, %s236, 1
          %s241 = smul.addr %s240, 8
          %s242 = smul.addr %s238, 16
          %s243 = sadd.s32 %s241, %s242
          %s244 = smul.addr %s243, 4
          %s245 = scalar_lea.vmem %s0, %s244
          %s246 = smul.u32 2, %s25
        $region36: #{tpu_custom_call.1} parent=31 // pred_fallthru
          _
        // Predicated region
        $region37: #{tpu_custom_call.1} parent=31 // pred_check
          %p247 = pneg %p77
        $region38: #{tpu_custom_call.1} parent=31 // pred_check_branch
          %249 = sbr.rel (%p247) target = $region40
        $region39: #{tpu_custom_call.1} parent=31 // pred_region
          %p250 = scmp.lt.s32.totalorder %s24, 3
          %s251 = scalar_select %p250, %s24, 3
          %s252 = smul.addr %s251, 128
          %s253 = smul.addr %s252, 4
          %s254 = scalar_lea.vmem %s1, %s253
        $region40: #{tpu_custom_call.1} parent=31 // pred_fallthru
          _
      $region32: #{tpu_custom_call.1} parent=5 // pred_fallthru
        _
      %p255 = scmp.le.s32.totalorder 1, %s17
      %p256 = scmp.lt.s32.totalorder %s17, 5
      %p257 = pnand %p255, %p256
      %p258 = pneg %p257
      // Predicated region
      $region41: #{tpu_custom_call.1} parent=5 // pred_check
        _
      $region42: #{tpu_custom_call.1} parent=5 // pred_check_branch
        %260 = sbr.rel (%p257) target = $region44
      $region43: #{tpu_custom_call.1} parent=5 // pred_region
        %s261 = ssub.s32 %s17, 1
        %s262 = smul.u32 2, %s27
        %p263 = scmp.lt.s32.totalorder %s26, 3
        %s264 = scalar_select %p263, %s26, 3
        %p265 = scmp.lt.s32.totalorder %s262, 1
        %s266 = scalar_select %p265, %s262, 1
        %s267 = smul.addr %s266, 8
        %s268 = smul.addr %s264, 16
        %s269 = sadd.s32 %s267, %s268
        %s270 = smul.addr %s269, 4
        %s271 = scalar_lea.vmem %s0, %s270
        %p272 = pneg %p57
        %p273 = pneg %p54
        %p274 = scmp.lt.s32.totalorder %s26, 3
        %s275 = scalar_select %p274, %s26, 3
        %s276 = smul.addr %s275, 128
        %s277 = smul.addr %s276, 4
        %s278 = scalar_lea.vmem %s1, %s277
        %p279 = pneg %p83
        %p280 = pneg %p80
        %p281 = scmp.lt.s32.totalorder %s27, 0
        %s282 = scalar_select %p281, %s27, 0
        %s283 = smul.addr %s282, 8
        %s284 = scalar_lea.vmem %s2, %s283
        %p285 = pneg %p109
        %p286 = pneg %p106
        %p287 = pneg %p130
        %p288 = pneg %p127
        %p289 = pneg %p151
        %p290 = pneg %p148
        %p291 = pneg %p172
        %p292 = pneg %p169
        %p293 = pneg %p198
        %p294 = pneg %p195
        %s295 = sand.u32 %s185, 1
        %s296 = scalar_lea.sflag [#allocation5], %s295
        %s297 = sand.u32 %s185, 1
        %s298 = scalar_lea.vmem [#allocation4], %s297
        %s299 = smul.u32 2, %s27
        %p300 = scmp.lt.s32.totalorder %s26, 3
        %s301 = scalar_select %p300, %s26, 3
        %p302 = scmp.lt.s32.totalorder %s299, 1
        %s303 = scalar_select %p302, %s299, 1
        %s304 = smul.addr %s303, 8
        %s305 = smul.addr %s301, 16
        %s306 = sadd.s32 %s304, %s305
        %s307 = smul.addr %s306, 4
        %s308 = scalar_lea.vmem %s0, %s307
        %s309 = smul.u32 2, %s27
        %p310 = scmp.lt.s32.totalorder %s26, 3
        %s311 = scalar_select %p310, %s26, 3
        %s312 = smul.addr %s311, 128
        %s313 = smul.addr %s312, 4
        %s314 = scalar_lea.vmem %s1, %s313
        %p315 = scmp.lt.s32.totalorder %s27, 0
        %s316 = scalar_select %p315, %s27, 0
        %s317 = smul.addr %s316, 8
        %s318 = scalar_lea.vmem %s2, %s317
        %p320 = scmp.eq.s32.totalorder %s27, 0
        // Predicated region
        $region45: #{tpu_custom_call.1} parent=43 // pred_check
          %p321 = pneg %p320
        $region46: #{tpu_custom_call.1} parent=43 // pred_check_branch
          %323 = sbr.rel (%p321) target = $region48
        $region47: #{tpu_custom_call.1} parent=43 // pred_region
          %vm324 = vcmask 31744
          %325 = vst.msk [vmem:[#allocation2] sm:$0xff] %vm324, 0.0
          %326 = vst.msk [vmem:[#allocation2 + $0x8] sm:$0xff] %vm324, 0.0
          %327 = vst.msk [vmem:[#allocation2 + $0x10] sm:$0xff] %vm324, 0.0
          %328 = vst.msk [vmem:[#allocation2 + $0x18] sm:$0xff] %vm324, 0.0
          %329 = vst.msk [vmem:[#allocation2 + $0x20] sm:$0xff] %vm324, 0.0
          %330 = vst.msk [vmem:[#allocation2 + $0x28] sm:$0xff] %vm324, 0.0
          %331 = vst.msk [vmem:[#allocation2 + $0x30] sm:$0xff] %vm324, 0.0
          %332 = vst.msk [vmem:[#allocation2 + $0x38] sm:$0xff] %vm324, 0.0
          %333 = vst.msk [vmem:[#allocation2 + $0x40] sm:$0xff] %vm324, 0.0
          %334 = vst.msk [vmem:[#allocation2 + $0x48] sm:$0xff] %vm324, 0.0
          %335 = vst.msk [vmem:[#allocation2 + $0x50] sm:$0xff] %vm324, 0.0
          %336 = vst.msk [vmem:[#allocation2 + $0x58] sm:$0xff] %vm324, 0.0
          %337 = vst.msk [vmem:[#allocation2 + $0x60] sm:$0xff] %vm324, 0.0
          %338 = vst.msk [vmem:[#allocation2 + $0x68] sm:$0xff] %vm324, 0.0
          %339 = vst.msk [vmem:[#allocation2 + $0x70] sm:$0xff] %vm324, 0.0
          %340 = vst.msk [vmem:[#allocation2 + $0x78] sm:$0xff] %vm324, 0.0
        $region48: #{tpu_custom_call.1} parent=43 // pred_fallthru
          _
        %v341 = vld [vmem:[%s308] sm:$0xff]
        %v342 = vld [vmem:[%s308 + $0x8] sm:$0xff]
        %v343 = vld [vmem:[%s308 + $0x10] sm:$0xff]
        %v344 = vld [vmem:[%s308 + $0x18] sm:$0xff]
        %v345 = vld [vmem:[%s308 + $0x20] sm:$0xff]
        %v346 = vld [vmem:[%s308 + $0x28] sm:$0xff]
        %v347 = vld [vmem:[%s308 + $0x30] sm:$0xff]
        %v348 = vld [vmem:[%s308 + $0x38] sm:$0xff]
        %v349 = vld [vmem:[%s314] sm:$0xf]
        %v350 = vld [vmem:[%s314 + $0x4] sm:$0xf]
        %v351 = vld [vmem:[%s314 + $0x8] sm:$0xf]
        %v352 = vld [vmem:[%s314 + $0xc] sm:$0xf]
        %v353 = vld [vmem:[%s314 + $0x10] sm:$0xf]
        %v354 = vld [vmem:[%s314 + $0x14] sm:$0xf]
        %v355 = vld [vmem:[%s314 + $0x18] sm:$0xf]
        %v356 = vld [vmem:[%s314 + $0x1c] sm:$0xf]
        %v357 = vld [vmem:[%s314 + $0x20] sm:$0xf]
        %v358 = vld [vmem:[%s314 + $0x24] sm:$0xf]
        %v359 = vld [vmem:[%s314 + $0x28] sm:$0xf]
        %v360 = vld [vmem:[%s314 + $0x2c] sm:$0xf]
        %v361 = vld [vmem:[%s314 + $0x30] sm:$0xf]
        %v362 = vld [vmem:[%s314 + $0x34] sm:$0xf]
        %v363 = vld [vmem:[%s314 + $0x38] sm:$0xf]
        %v364 = vld [vmem:[%s314 + $0x3c] sm:$0xf]
        %v365 = vld [vmem:[%s314 + $0x40] sm:$0xf]
        %v366 = vld [vmem:[%s314 + $0x44] sm:$0xf]
        %v367 = vld [vmem:[%s314 + $0x48] sm:$0xf]
        %v368 = vld [vmem:[%s314 + $0x4c] sm:$0xf]
        %v369 = vld [vmem:[%s314 + $0x50] sm:$0xf]
        %v370 = vld [vmem:[%s314 + $0x54] sm:$0xf]
        %v371 = vld [vmem:[%s314 + $0x58] sm:$0xf]
        %v372 = vld [vmem:[%s314 + $0x5c] sm:$0xf]
        %v373 = vld [vmem:[%s314 + $0x60] sm:$0xf]
        %v374 = vld [vmem:[%s314 + $0x64] sm:$0xf]
        %v375 = vld [vmem:[%s314 + $0x68] sm:$0xf]
        %v376 = vld [vmem:[%s314 + $0x6c] sm:$0xf]
        %v377 = vld [vmem:[%s314 + $0x70] sm:$0xf]
        %v378 = vld [vmem:[%s314 + $0x74] sm:$0xf]
        %v379 = vld [vmem:[%s314 + $0x78] sm:$0xf]
        %v380 = vld [vmem:[%s314 + $0x7c] sm:$0xf]
        %v381 = vld [vmem:[%s314 + $0x80] sm:$0xf]
        %v382 = vld [vmem:[%s314 + $0x84] sm:$0xf]
        %v383 = vld [vmem:[%s314 + $0x88] sm:$0xf]
        %v384 = vld [vmem:[%s314 + $0x8c] sm:$0xf]
        %v385 = vld [vmem:[%s314 + $0x90] sm:$0xf]
        %v386 = vld [vmem:[%s314 + $0x94] sm:$0xf]
        %v387 = vld [vmem:[%s314 + $0x98] sm:$0xf]
        %v388 = vld [vmem:[%s314 + $0x9c] sm:$0xf]
        %v389 = vld [vmem:[%s314 + $0xa0] sm:$0xf]
        %v390 = vld [vmem:[%s314 + $0xa4] sm:$0xf]
        %v391 = vld [vmem:[%s314 + $0xa8] sm:$0xf]
        %v392 = vld [vmem:[%s314 + $0xac] sm:$0xf]
        %v393 = vld [vmem:[%s314 + $0xb0] sm:$0xf]
        %v394 = vld [vmem:[%s314 + $0xb4] sm:$0xf]
        %v395 = vld [vmem:[%s314 + $0xb8] sm:$0xf]
        %v396 = vld [vmem:[%s314 + $0xbc] sm:$0xf]
        %v397 = vld [vmem:[%s314 + $0xc0] sm:$0xf]
        %v398 = vld [vmem:[%s314 + $0xc4] sm:$0xf]
        %v399 = vld [vmem:[%s314 + $0xc8] sm:$0xf]
        %v400 = vld [vmem:[%s314 + $0xcc] sm:$0xf]
        %v401 = vld [vmem:[%s314 + $0xd0] sm:$0xf]
        %v402 = vld [vmem:[%s314 + $0xd4] sm:$0xf]
        %v403 = vld [vmem:[%s314 + $0xd8] sm:$0xf]
        %v404 = vld [vmem:[%s314 + $0xdc] sm:$0xf]
        %v405 = vld [vmem:[%s314 + $0xe0] sm:$0xf]
        %v406 = vld [vmem:[%s314 + $0xe4] sm:$0xf]
        %v407 = vld [vmem:[%s314 + $0xe8] sm:$0xf]
        %v408 = vld [vmem:[%s314 + $0xec] sm:$0xf]
        %v409 = vld [vmem:[%s314 + $0xf0] sm:$0xf]
        %v410 = vld [vmem:[%s314 + $0xf4] sm:$0xf]
        %v411 = vld [vmem:[%s314 + $0xf8] sm:$0xf]
        %v412 = vld [vmem:[%s314 + $0xfc] sm:$0xf]
        %v413 = vld [vmem:[%s314 + $0x100] sm:$0xf]
        %v414 = vld [vmem:[%s314 + $0x104] sm:$0xf]
        %v415 = vld [vmem:[%s314 + $0x108] sm:$0xf]
        %v416 = vld [vmem:[%s314 + $0x10c] sm:$0xf]
        %v417 = vld [vmem:[%s314 + $0x110] sm:$0xf]
        %v418 = vld [vmem:[%s314 + $0x114] sm:$0xf]
        %v419 = vld [vmem:[%s314 + $0x118] sm:$0xf]
        %v420 = vld [vmem:[%s314 + $0x11c] sm:$0xf]
        %v421 = vld [vmem:[%s314 + $0x120] sm:$0xf]
        %v422 = vld [vmem:[%s314 + $0x124] sm:$0xf]
        %v423 = vld [vmem:[%s314 + $0x128] sm:$0xf]
        %v424 = vld [vmem:[%s314 + $0x12c] sm:$0xf]
        %v425 = vld [vmem:[%s314 + $0x130] sm:$0xf]
        %v426 = vld [vmem:[%s314 + $0x134] sm:$0xf]
        %v427 = vld [vmem:[%s314 + $0x138] sm:$0xf]
        %v428 = vld [vmem:[%s314 + $0x13c] sm:$0xf]
        %v429 = vld [vmem:[%s314 + $0x140] sm:$0xf]
        %v430 = vld [vmem:[%s314 + $0x144] sm:$0xf]
        %v431 = vld [vmem:[%s314 + $0x148] sm:$0xf]
        %v432 = vld [vmem:[%s314 + $0x14c] sm:$0xf]
        %v433 = vld [vmem:[%s314 + $0x150] sm:$0xf]
        %v434 = vld [vmem:[%s314 + $0x154] sm:$0xf]
        %v435 = vld [vmem:[%s314 + $0x158] sm:$0xf]
        %v436 = vld [vmem:[%s314 + $0x15c] sm:$0xf]
        %v437 = vld [vmem:[%s314 + $0x160] sm:$0xf]
        %v438 = vld [vmem:[%s314 + $0x164] sm:$0xf]
        %v439 = vld [vmem:[%s314 + $0x168] sm:$0xf]
        %v440 = vld [vmem:[%s314 + $0x16c] sm:$0xf]
        %v441 = vld [vmem:[%s314 + $0x170] sm:$0xf]
        %v442 = vld [vmem:[%s314 + $0x174] sm:$0xf]
        %v443 = vld [vmem:[%s314 + $0x178] sm:$0xf]
        %v444 = vld [vmem:[%s314 + $0x17c] sm:$0xf]
        %v445 = vld [vmem:[%s314 + $0x180] sm:$0xf]
        %v446 = vld [vmem:[%s314 + $0x184] sm:$0xf]
        %v447 = vld [vmem:[%s314 + $0x188] sm:$0xf]
        %v448 = vld [vmem:[%s314 + $0x18c] sm:$0xf]
        %v449 = vld [vmem:[%s314 + $0x190] sm:$0xf]
        %v450 = vld [vmem:[%s314 + $0x194] sm:$0xf]
        %v451 = vld [vmem:[%s314 + $0x198] sm:$0xf]
        %v452 = vld [vmem:[%s314 + $0x19c] sm:$0xf]
        %v453 = vld [vmem:[%s314 + $0x1a0] sm:$0xf]
        %v454 = vld [vmem:[%s314 + $0x1a4] sm:$0xf]
        %v455 = vld [vmem:[%s314 + $0x1a8] sm:$0xf]
        %v456 = vld [vmem:[%s314 + $0x1ac] sm:$0xf]
        %v457 = vld [vmem:[%s314 + $0x1b0] sm:$0xf]
        %v458 = vld [vmem:[%s314 + $0x1b4] sm:$0xf]
        %v459 = vld [vmem:[%s314 + $0x1b8] sm:$0xf]
        %v460 = vld [vmem:[%s314 + $0x1bc] sm:$0xf]
        %v461 = vld [vmem:[%s314 + $0x1c0] sm:$0xf]
        %v462 = vld [vmem:[%s314 + $0x1c4] sm:$0xf]
        %v463 = vld [vmem:[%s314 + $0x1c8] sm:$0xf]
        %v464 = vld [vmem:[%s314 + $0x1cc] sm:$0xf]
        %v465 = vld [vmem:[%s314 + $0x1d0] sm:$0xf]
        %v466 = vld [vmem:[%s314 + $0x1d4] sm:$0xf]
        %v467 = vld [vmem:[%s314 + $0x1d8] sm:$0xf]
        %v468 = vld [vmem:[%s314 + $0x1dc] sm:$0xf]
        %v469 = vld [vmem:[%s314 + $0x1e0] sm:$0xf]
        %v470 = vld [vmem:[%s314 + $0x1e4] sm:$0xf]
        %v471 = vld [vmem:[%s314 + $0x1e8] sm:$0xf]
        %v472 = vld [vmem:[%s314 + $0x1ec] sm:$0xf]
        %v473 = vld [vmem:[%s314 + $0x1f0] sm:$0xf]
        %v474 = vld [vmem:[%s314 + $0x1f4] sm:$0xf]
        %v475 = vld [vmem:[%s314 + $0x1f8] sm:$0xf]
        %v476 = vld [vmem:[%s314 + $0x1fc] sm:$0xf]
        %v485 = vunpack.c.l.b16 %v341
        %v486 = vunpack.c.h.b16 %v341
        %v487 = vunpack.c.l.b16 %v342
        %v488 = vunpack.c.h.b16 %v342
        %v489 = vunpack.c.l.b16 %v343
        %v490 = vunpack.c.h.b16 %v343
        %v491 = vunpack.c.l.b16 %v344
        %v492 = vunpack.c.h.b16 %v344
        %v493 = vunpack.c.l.b16 %v345
        %v494 = vunpack.c.h.b16 %v345
        %v495 = vunpack.c.l.b16 %v346
        %v496 = vunpack.c.h.b16 %v346
        %v497 = vunpack.c.l.b16 %v347
        %v498 = vunpack.c.h.b16 %v347
        %v499 = vunpack.c.l.b16 %v348
        %v500 = vunpack.c.h.b16 %v348
        %v501 = vpack.c.b16 %v493, %v485
        %v502 = vpack.c.b16 %v494, %v486
        %v503 = vpack.c.b16 %v495, %v487
        %v504 = vpack.c.b16 %v496, %v488
        %v505 = vpack.c.b16 %v497, %v489
        %v506 = vpack.c.b16 %v498, %v490
        %v507 = vpack.c.b16 %v499, %v491
        %v508 = vpack.c.b16 %v500, %v492
        %v645 = vunpack.c.l.b16 %v349
        %v646 = vunpack.c.l.b16 %v350
        %v647 = vunpack.c.l.b16 %v351
        %v648 = vunpack.c.l.b16 %v352
        %v649 = vunpack.c.l.b16 %v353
        %v650 = vunpack.c.l.b16 %v354
        %v651 = vunpack.c.l.b16 %v355
        %v652 = vunpack.c.l.b16 %v356
        %v653 = vunpack.c.l.b16 %v357
        %v654 = vunpack.c.l.b16 %v358
        %v655 = vunpack.c.l.b16 %v359
        %v656 = vunpack.c.l.b16 %v360
        %v657 = vunpack.c.l.b16 %v361
        %v658 = vunpack.c.l.b16 %v362
        %v659 = vunpack.c.l.b16 %v363
        %v660 = vunpack.c.l.b16 %v364
        %v661 = vunpack.c.l.b16 %v365
        %v662 = vunpack.c.l.b16 %v366
        %v663 = vunpack.c.l.b16 %v367
        %v664 = vunpack.c.l.b16 %v368
        %v665 = vunpack.c.l.b16 %v369
        %v666 = vunpack.c.l.b16 %v370
        %v667 = vunpack.c.l.b16 %v371
        %v668 = vunpack.c.l.b16 %v372
        %v669 = vunpack.c.l.b16 %v373
        %v670 = vunpack.c.l.b16 %v374
        %v671 = vunpack.c.l.b16 %v375
        %v672 = vunpack.c.l.b16 %v376
        %v673 = vunpack.c.l.b16 %v377
        %v674 = vunpack.c.l.b16 %v378
        %v675 = vunpack.c.l.b16 %v379
        %v676 = vunpack.c.l.b16 %v380
        %v677 = vunpack.c.l.b16 %v381
        %v678 = vunpack.c.l.b16 %v382
        %v679 = vunpack.c.l.b16 %v383
        %v680 = vunpack.c.l.b16 %v384
        %v681 = vunpack.c.l.b16 %v385
        %v682 = vunpack.c.l.b16 %v386
        %v683 = vunpack.c.l.b16 %v387
        %v684 = vunpack.c.l.b16 %v388
        %v685 = vunpack.c.l.b16 %v389
        %v686 = vunpack.c.l.b16 %v390
        %v687 = vunpack.c.l.b16 %v391
        %v688 = vunpack.c.l.b16 %v392
        %v689 = vunpack.c.l.b16 %v393
        %v690 = vunpack.c.l.b16 %v394
        %v691 = vunpack.c.l.b16 %v395
        %v692 = vunpack.c.l.b16 %v396
        %v693 = vunpack.c.l.b16 %v397
        %v694 = vunpack.c.l.b16 %v398
        %v695 = vunpack.c.l.b16 %v399
        %v696 = vunpack.c.l.b16 %v400
        %v697 = vunpack.c.l.b16 %v401
        %v698 = vunpack.c.l.b16 %v402
        %v699 = vunpack.c.l.b16 %v403
        %v700 = vunpack.c.l.b16 %v404
        %v701 = vunpack.c.l.b16 %v405
        %v702 = vunpack.c.l.b16 %v406
        %v703 = vunpack.c.l.b16 %v407
        %v704 = vunpack.c.l.b16 %v408
        %v705 = vunpack.c.l.b16 %v409
        %v706 = vunpack.c.l.b16 %v410
        %v707 = vunpack.c.l.b16 %v411
        %v708 = vunpack.c.l.b16 %v412
        %v709 = vunpack.c.l.b16 %v413
        %v710 = vunpack.c.l.b16 %v414
        %v711 = vunpack.c.l.b16 %v415
        %v712 = vunpack.c.l.b16 %v416
        %v713 = vunpack.c.l.b16 %v417
        %v714 = vunpack.c.l.b16 %v418
        %v715 = vunpack.c.l.b16 %v419
        %v716 = vunpack.c.l.b16 %v420
        %v717 = vunpack.c.l.b16 %v421
        %v718 = vunpack.c.l.b16 %v422
        %v719 = vunpack.c.l.b16 %v423
        %v720 = vunpack.c.l.b16 %v424
        %v721 = vunpack.c.l.b16 %v425
        %v722 = vunpack.c.l.b16 %v426
        %v723 = vunpack.c.l.b16 %v427
        %v724 = vunpack.c.l.b16 %v428
        %v725 = vunpack.c.l.b16 %v429
        %v726 = vunpack.c.l.b16 %v430
        %v727 = vunpack.c.l.b16 %v431
        %v728 = vunpack.c.l.b16 %v432
        %v729 = vunpack.c.l.b16 %v433
        %v730 = vunpack.c.l.b16 %v434
        %v731 = vunpack.c.l.b16 %v435
        %v732 = vunpack.c.l.b16 %v436
        %v733 = vunpack.c.l.b16 %v437
        %v734 = vunpack.c.l.b16 %v438
        %v735 = vunpack.c.l.b16 %v439
        %v736 = vunpack.c.l.b16 %v440
        %v737 = vunpack.c.l.b16 %v441
        %v738 = vunpack.c.l.b16 %v442
        %v739 = vunpack.c.l.b16 %v443
        %v740 = vunpack.c.l.b16 %v444
        %v741 = vunpack.c.l.b16 %v445
        %v742 = vunpack.c.l.b16 %v446
        %v743 = vunpack.c.l.b16 %v447
        %v744 = vunpack.c.l.b16 %v448
        %v745 = vunpack.c.l.b16 %v449
        %v746 = vunpack.c.l.b16 %v450
        %v747 = vunpack.c.l.b16 %v451
        %v748 = vunpack.c.l.b16 %v452
        %v749 = vunpack.c.l.b16 %v453
        %v750 = vunpack.c.l.b16 %v454
        %v751 = vunpack.c.l.b16 %v455
        %v752 = vunpack.c.l.b16 %v456
        %v753 = vunpack.c.l.b16 %v457
        %v754 = vunpack.c.l.b16 %v458
        %v755 = vunpack.c.l.b16 %v459
        %v756 = vunpack.c.l.b16 %v460
        %v757 = vunpack.c.l.b16 %v461
        %v758 = vunpack.c.l.b16 %v462
        %v759 = vunpack.c.l.b16 %v463
        %v760 = vunpack.c.l.b16 %v464
        %v761 = vunpack.c.l.b16 %v465
        %v762 = vunpack.c.l.b16 %v466
        %v763 = vunpack.c.l.b16 %v467
        %v764 = vunpack.c.l.b16 %v468
        %v765 = vunpack.c.l.b16 %v469
        %v766 = vunpack.c.l.b16 %v470
        %v767 = vunpack.c.l.b16 %v471
        %v768 = vunpack.c.l.b16 %v472
        %v769 = vunpack.c.l.b16 %v473
        %v770 = vunpack.c.l.b16 %v474
        %v771 = vunpack.c.l.b16 %v475
        %v772 = vunpack.c.l.b16 %v476
        %v773 = vpack.c.b16 %v646, %v645
        %v774 = vpack.c.b16 %v648, %v647
        %v775 = vpack.c.b16 %v650, %v649
        %v776 = vpack.c.b16 %v652, %v651
        %v777 = vpack.c.b16 %v654, %v653
        %v778 = vpack.c.b16 %v656, %v655
        %v779 = vpack.c.b16 %v658, %v657
        %v780 = vpack.c.b16 %v660, %v659
        %v781 = vpack.c.b16 %v662, %v661
        %v782 = vpack.c.b16 %v664, %v663
        %v783 = vpack.c.b16 %v666, %v665
        %v784 = vpack.c.b16 %v668, %v667
        %v785 = vpack.c.b16 %v670, %v669
        %v786 = vpack.c.b16 %v672, %v671
        %v787 = vpack.c.b16 %v674, %v673
        %v788 = vpack.c.b16 %v676, %v675
        %v789 = vpack.c.b16 %v678, %v677
        %v790 = vpack.c.b16 %v680, %v679
        %v791 = vpack.c.b16 %v682, %v681
        %v792 = vpack.c.b16 %v684, %v683
        %v793 = vpack.c.b16 %v686, %v685
        %v794 = vpack.c.b16 %v688, %v687
        %v795 = vpack.c.b16 %v690, %v689
        %v796 = vpack.c.b16 %v692, %v691
        %v797 = vpack.c.b16 %v694, %v693
        %v798 = vpack.c.b16 %v696, %v695
        %v799 = vpack.c.b16 %v698, %v697
        %v800 = vpack.c.b16 %v700, %v699
        %v801 = vpack.c.b16 %v702, %v701
        %v802 = vpack.c.b16 %v704, %v703
        %v803 = vpack.c.b16 %v706, %v705
        %v804 = vpack.c.b16 %v708, %v707
        %v805 = vpack.c.b16 %v710, %v709
        %v806 = vpack.c.b16 %v712, %v711
        %v807 = vpack.c.b16 %v714, %v713
        %v808 = vpack.c.b16 %v716, %v715
        %v809 = vpack.c.b16 %v718, %v717
        %v810 = vpack.c.b16 %v720, %v719
        %v811 = vpack.c.b16 %v722, %v721
        %v812 = vpack.c.b16 %v724, %v723
        %v813 = vpack.c.b16 %v726, %v725
        %v814 = vpack.c.b16 %v728, %v727
        %v815 = vpack.c.b16 %v730, %v729
        %v816 = vpack.c.b16 %v732, %v731
        %v817 = vpack.c.b16 %v734, %v733
        %v818 = vpack.c.b16 %v736, %v735
        %v819 = vpack.c.b16 %v738, %v737
        %v820 = vpack.c.b16 %v740, %v739
        %v821 = vpack.c.b16 %v742, %v741
        %v822 = vpack.c.b16 %v744, %v743
        %v823 = vpack.c.b16 %v746, %v745
        %v824 = vpack.c.b16 %v748, %v747
        %v825 = vpack.c.b16 %v750, %v749
        %v826 = vpack.c.b16 %v752, %v751
        %v827 = vpack.c.b16 %v754, %v753
        %v828 = vpack.c.b16 %v756, %v755
        %v829 = vpack.c.b16 %v758, %v757
        %v830 = vpack.c.b16 %v760, %v759
        %v831 = vpack.c.b16 %v762, %v761
        %v832 = vpack.c.b16 %v764, %v763
        %v833 = vpack.c.b16 %v766, %v765
        %v834 = vpack.c.b16 %v768, %v767
        %v835 = vpack.c.b16 %v770, %v769
        %v836 = vpack.c.b16 %v772, %v771
        %901 = vmatprep.subr.bf16.mxu0 0
        %902 = vmatpush1.bf16.msra.mxu0 %v773
        %903 = vmatprep.subr.bf16.mxu0 0
        %904 = vmatpush1.bf16.msra.mxu0 %v774
        %905 = vmatprep.subr.bf16.mxu0 0
        %906 = vmatpush1.bf16.msra.mxu0 %v775
        %907 = vmatprep.subr.bf16.mxu0 0
        %908 = vmatpush1.bf16.msra.mxu0 %v776
        %909 = vmatprep.subr.bf16.mxu0 0
        %910 = vmatpush1.bf16.msra.mxu0 %v777
        %911 = vmatprep.subr.bf16.mxu0 0
        %912 = vmatpush1.bf16.msra.mxu0 %v778
        %913 = vmatprep.subr.bf16.mxu0 0
        %914 = vmatpush1.bf16.msra.mxu0 %v779
        %915 = vmatprep.subr.bf16.mxu0 0
        %916 = vmatpush1.bf16.msra.mxu0 %v780
        %917 = vmatprep.subr.bf16.mxu0 0
        %918 = vmatpush1.bf16.msra.mxu0 %v781
        %919 = vmatprep.subr.bf16.mxu0 0
        %920 = vmatpush1.bf16.msra.mxu0 %v782
        %921 = vmatprep.subr.bf16.mxu0 0
        %922 = vmatpush1.bf16.msra.mxu0 %v783
        %923 = vmatprep.subr.bf16.mxu0 0
        %924 = vmatpush1.bf16.msra.mxu0 %v784
        %925 = vmatprep.subr.bf16.mxu0 0
        %926 = vmatpush1.bf16.msra.mxu0 %v785
        %927 = vmatprep.subr.bf16.mxu0 0
        %928 = vmatpush1.bf16.msra.mxu0 %v786
        %929 = vmatprep.subr.bf16.mxu0 0
        %930 = vmatpush1.bf16.msra.mxu0 %v787
        %931 = vmatprep.subr.bf16.mxu0 0
        %932 = vmatpush1.bf16.msra.mxu0 %v788
        %933 = vmatprep.mubr.bf16.mxu0 %v502
        %934 = vmatmul.mubr.bf16.gmra.mrb[0].mxu0 %v501
        %v935 = vpop.f32.mrb[0].mxu0
        %v936 = vadd.f32 0.0, %v935
        %v937 = vpop.f32.mrb[0].mxu0
        %v938 = vpop.f32.mrb[0].mxu0
        %v939 = vadd.f32 0.0, %v938
        %v940 = vpop.f32.mrb[0].mxu0
        %941 = vdwg.mxu0
        %942 = vmatprep.subr.bf16.mxu0 0
        %943 = vmatpush1.bf16.msra.mxu0 %v789
        %944 = vmatprep.subr.bf16.mxu0 0
        %945 = vmatpush1.bf16.msra.mxu0 %v790
        %946 = vmatprep.subr.bf16.mxu0 0
        %947 = vmatpush1.bf16.msra.mxu0 %v791
        %948 = vmatprep.subr.bf16.mxu0 0
        %949 = vmatpush1.bf16.msra.mxu0 %v792
        %950 = vmatprep.subr.bf16.mxu0 0
        %951 = vmatpush1.bf16.msra.mxu0 %v793
        %952 = vmatprep.subr.bf16.mxu0 0
        %953 = vmatpush1.bf16.msra.mxu0 %v794
        %954 = vmatprep.subr.bf16.mxu0 0
        %955 = vmatpush1.bf16.msra.mxu0 %v795
        %956 = vmatprep.subr.bf16.mxu0 0
        %957 = vmatpush1.bf16.msra.mxu0 %v796
        %958 = vmatprep.subr.bf16.mxu0 0
        %959 = vmatpush1.bf16.msra.mxu0 %v797
        %960 = vmatprep.subr.bf16.mxu0 0
        %961 = vmatpush1.bf16.msra.mxu0 %v798
        %962 = vmatprep.subr.bf16.mxu0 0
        %963 = vmatpush1.bf16.msra.mxu0 %v799
        %964 = vmatprep.subr.bf16.mxu0 0
        %965 = vmatpush1.bf16.msra.mxu0 %v800
        %966 = vmatprep.subr.bf16.mxu0 0
        %967 = vmatpush1.bf16.msra.mxu0 %v801
        %968 = vmatprep.subr.bf16.mxu0 0
        %969 = vmatpush1.bf16.msra.mxu0 %v802
        %970 = vmatprep.subr.bf16.mxu0 0
        %971 = vmatpush1.bf16.msra.mxu0 %v803
        %972 = vmatprep.subr.bf16.mxu0 0
        %973 = vmatpush1.bf16.msra.mxu0 %v804
        %974 = vmatprep.mubr.bf16.mxu0 %v504
        %975 = vmatmul.mubr.bf16.gmra.mrb[0].mxu0 %v503
        %v976 = vpop.f32.mrb[0].mxu0
        %v977 = vadd.f32 %v936, %v976
        %v978 = vpop.f32.mrb[0].mxu0
        %v979 = vpop.f32.mrb[0].mxu0
        %v980 = vadd.f32 %v939, %v979
        %v981 = vpop.f32.mrb[0].mxu0
        %982 = vdwg.mxu0
        %983 = vmatprep.subr.bf16.mxu0 0
        %984 = vmatpush1.bf16.msra.mxu0 %v805
        %985 = vmatprep.subr.bf16.mxu0 0
        %986 = vmatpush1.bf16.msra.mxu0 %v806
        %987 = vmatprep.subr.bf16.mxu0 0
        %988 = vmatpush1.bf16.msra.mxu0 %v807
        %989 = vmatprep.subr.bf16.mxu0 0
        %990 = vmatpush1.bf16.msra.mxu0 %v808
        %991 = vmatprep.subr.bf16.mxu0 0
        %992 = vmatpush1.bf16.msra.mxu0 %v809
        %993 = vmatprep.subr.bf16.mxu0 0
        %994 = vmatpush1.bf16.msra.mxu0 %v810
        %995 = vmatprep.subr.bf16.mxu0 0
        %996 = vmatpush1.bf16.msra.mxu0 %v811
        %997 = vmatprep.subr.bf16.mxu0 0
        %998 = vmatpush1.bf16.msra.mxu0 %v812
        %999 = vmatprep.subr.bf16.mxu0 0
        %1000 = vmatpush1.bf16.msra.mxu0 %v813
        %1001 = vmatprep.subr.bf16.mxu0 0
        %1002 = vmatpush1.bf16.msra.mxu0 %v814
        %1003 = vmatprep.subr.bf16.mxu0 0
        %1004 = vmatpush1.bf16.msra.mxu0 %v815
        %1005 = vmatprep.subr.bf16.mxu0 0
        %1006 = vmatpush1.bf16.msra.mxu0 %v816
        %1007 = vmatprep.subr.bf16.mxu0 0
        %1008 = vmatpush1.bf16.msra.mxu0 %v817
        %1009 = vmatprep.subr.bf16.mxu0 0
        %1010 = vmatpush1.bf16.msra.mxu0 %v818
        %1011 = vmatprep.subr.bf16.mxu0 0
        %1012 = vmatpush1.bf16.msra.mxu0 %v819
        %1013 = vmatprep.subr.bf16.mxu0 0
        %1014 = vmatpush1.bf16.msra.mxu0 %v820
        %1015 = vmatprep.mubr.bf16.mxu0 %v506
        %1016 = vmatmul.mubr.bf16.gmra.mrb[0].mxu0 %v505
        %v1017 = vpop.f32.mrb[0].mxu0
        %v1018 = vadd.f32 %v977, %v1017
        %v1019 = vpop.f32.mrb[0].mxu0
        %v1020 = vpop.f32.mrb[0].mxu0
        %v1021 = vadd.f32 %v980, %v1020
        %v1022 = vpop.f32.mrb[0].mxu0
        %1023 = vdwg.mxu0
        %1024 = vmatprep.subr.bf16.mxu0 0
        %1025 = vmatpush1.bf16.msra.mxu0 %v821
        %1026 = vmatprep.subr.bf16.mxu0 0
        %1027 = vmatpush1.bf16.msra.mxu0 %v822
        %1028 = vmatprep.subr.bf16.mxu0 0
        %1029 = vmatpush1.bf16.msra.mxu0 %v823
        %1030 = vmatprep.subr.bf16.mxu0 0
        %1031 = vmatpush1.bf16.msra.mxu0 %v824
        %1032 = vmatprep.subr.bf16.mxu0 0
        %1033 = vmatpush1.bf16.msra.mxu0 %v825
        %1034 = vmatprep.subr.bf16.mxu0 0
        %1035 = vmatpush1.bf16.msra.mxu0 %v826
        %1036 = vmatprep.subr.bf16.mxu0 0
        %1037 = vmatpush1.bf16.msra.mxu0 %v827
        %1038 = vmatprep.subr.bf16.mxu0 0
        %1039 = vmatpush1.bf16.msra.mxu0 %v828
        %1040 = vmatprep.subr.bf16.mxu0 0
        %1041 = vmatpush1.bf16.msra.mxu0 %v829
        %1042 = vmatprep.subr.bf16.mxu0 0
        %1043 = vmatpush1.bf16.msra.mxu0 %v830
        %1044 = vmatprep.subr.bf16.mxu0 0
        %1045 = vmatpush1.bf16.msra.mxu0 %v831
        %1046 = vmatprep.subr.bf16.mxu0 0
        %1047 = vmatpush1.bf16.msra.mxu0 %v832
        %1048 = vmatprep.subr.bf16.mxu0 0
        %1049 = vmatpush1.bf16.msra.mxu0 %v833
        %1050 = vmatprep.subr.bf16.mxu0 0
        %1051 = vmatpush1.bf16.msra.mxu0 %v834
        %1052 = vmatprep.subr.bf16.mxu0 0
        %1053 = vmatpush1.bf16.msra.mxu0 %v835
        %1054 = vmatprep.subr.bf16.mxu0 0
        %1055 = vmatpush1.bf16.msra.mxu0 %v836
        %1056 = vmatprep.mubr.bf16.mxu0 %v508
        %1057 = vmatmul.mubr.bf16.gmra.mrb[0].mxu0 %v507
        %v1058 = vpop.f32.mrb[0].mxu0
        %v1059 = vadd.f32 %v1018, %v1058
        %v1060 = vpop.f32.mrb[0].mxu0
        %v1061 = vpop.f32.mrb[0].mxu0
        %v1062 = vadd.f32 %v1021, %v1061
        %v1063 = vpop.f32.mrb[0].mxu0
        %1064 = vdwg.mxu0
        %v1065 = vld [vmem:[#allocation2] sm:$0xff]
        %v1066 = vld [vmem:[#allocation2 + $0x8] sm:$0xff]
        %v1067 = vld [vmem:[#allocation2 + $0x10] sm:$0xff]
        %v1068 = vld [vmem:[#allocation2 + $0x18] sm:$0xff]
        %v1069 = vld [vmem:[#allocation2 + $0x20] sm:$0xff]
        %v1070 = vld [vmem:[#allocation2 + $0x28] sm:$0xff]
        %v1071 = vld [vmem:[#allocation2 + $0x30] sm:$0xff]
        %v1072 = vld [vmem:[#allocation2 + $0x38] sm:$0xff]
        %v1073 = vld [vmem:[#allocation2 + $0x40] sm:$0xff]
        %v1074 = vld [vmem:[#allocation2 + $0x48] sm:$0xff]
        %v1075 = vld [vmem:[#allocation2 + $0x50] sm:$0xff]
        %v1076 = vld [vmem:[#allocation2 + $0x58] sm:$0xff]
        %v1077 = vld [vmem:[#allocation2 + $0x60] sm:$0xff]
        %v1078 = vld [vmem:[#allocation2 + $0x68] sm:$0xff]
        %v1079 = vld [vmem:[#allocation2 + $0x70] sm:$0xff]
        %v1080 = vld [vmem:[#allocation2 + $0x78] sm:$0xff]
        %v1081 = vld [vmem:[%s318] sm:$0xff]
        %v1082 = vld [vmem:[%s318 + $0x8] sm:$0xff]
        %v1083 = vld [vmem:[%s318 + $0x10] sm:$0xff]
        %v1084 = vld [vmem:[%s318 + $0x18] sm:$0xff]
        %v1085 = vld [vmem:[%s318 + $0x20] sm:$0xff]
        %v1086 = vld [vmem:[%s318 + $0x28] sm:$0xff]
        %v1087 = vld [vmem:[%s318 + $0x30] sm:$0xff]
        %v1088 = vld [vmem:[%s318 + $0x38] sm:$0xff]
        %v1089 = vld [vmem:[%s318 + $0x40] sm:$0xff]
        %v1090 = vld [vmem:[%s318 + $0x48] sm:$0xff]
        %v1091 = vld [vmem:[%s318 + $0x50] sm:$0xff]
        %v1092 = vld [vmem:[%s318 + $0x58] sm:$0xff]
        %v1093 = vld [vmem:[%s318 + $0x60] sm:$0xff]
        %v1094 = vld [vmem:[%s318 + $0x68] sm:$0xff]
        %v1095 = vld [vmem:[%s318 + $0x70] sm:$0xff]
        %v1096 = vld [vmem:[%s318 + $0x78] sm:$0xff]
        %vm1097 = vcmask 130048
        %v1099 = vsel %vm1097, %v1081, 0
        %v1102 = vsel %vm1097, %v1082, 0
        %v1105 = vsel %vm1097, %v1083, 0
        %v1108 = vsel %vm1097, %v1084, 0
        %v1111 = vsel %vm1097, %v1085, 0
        %v1114 = vsel %vm1097, %v1086, 0
        %v1117 = vsel %vm1097, %v1087, 0
        %v1120 = vsel %vm1097, %v1088, 0
        %v1123 = vsel %vm1097, %v1089, 0
        %v1126 = vsel %vm1097, %v1090, 0
        %v1129 = vsel %vm1097, %v1091, 0
        %v1132 = vsel %vm1097, %v1092, 0
        %v1135 = vsel %vm1097, %v1093, 0
        %v1138 = vsel %vm1097, %v1094, 0
        %v1141 = vsel %vm1097, %v1095, 0
        %v1144 = vsel %vm1097, %v1096, 0
        %1146 = vmatprep.subr.mxu0 0.0
        %1147 = vmatpush1.msra.mxu0 %v1059
        %1148 = vmatprep.subr.mxu0 0.0
        %1149 = vmatpush1.msra.mxu0 %v1062
        %1150 = vmatprep.subr.mxu0 0.0
        %1151 = vmatpush1.msra.mxu0 0.0
        %1152 = vmatprep.subr.mxu0 0.0
        %1153 = vmatpush1.msra.mxu0 0.0
        %1154 = vmatprep.subr.mxu0 0.0
        %1155 = vmatpush1.msra.mxu0 0.0
        %1156 = vmatprep.subr.mxu0 0.0
        %1157 = vmatpush1.msra.mxu0 0.0
        %1158 = vmatprep.subr.mxu0 0.0
        %1159 = vmatpush1.msra.mxu0 0.0
        %1160 = vmatprep.subr.mxu0 0.0
        %1161 = vmatpush1.msra.mxu0 0.0
        %1162 = vmatprep.subr.mxu0 0.0
        %1163 = vmatpush1.msra.mxu0 0.0
        %1164 = vmatprep.subr.mxu0 0.0
        %1165 = vmatpush1.msra.mxu0 0.0
        %1166 = vmatprep.subr.mxu0 0.0
        %1167 = vmatpush1.msra.mxu0 0.0
        %1168 = vmatprep.subr.mxu0 0.0
        %1169 = vmatpush1.msra.mxu0 0.0
        %1170 = vmatprep.subr.mxu0 0.0
        %1171 = vmatpush1.msra.mxu0 0.0
        %1172 = vmatprep.subr.mxu0 0.0
        %1173 = vmatpush1.msra.mxu0 0.0
        %1174 = vmatprep.subr.mxu0 0.0
        %1175 = vmatpush1.msra.mxu0 0.0
        %1176 = vmatprep.subr.mxu0 0.0
        %1177 = vmatpush1.msra.mxu0 0.0
        %1178 = vmatprep.subr.mxu0 0.0
        %1179 = vmatpush1.msra.mxu0 0.0
        %1180 = vmatprep.subr.mxu0 0.0
        %1181 = vmatpush1.msra.mxu0 0.0
        %1182 = vmatprep.subr.mxu0 0.0
        %1183 = vmatpush1.msra.mxu0 0.0
        %1184 = vmatprep.subr.mxu0 0.0
        %1185 = vmatpush1.msra.mxu0 0.0
        %1186 = vmatprep.subr.mxu0 0.0
        %1187 = vmatpush1.msra.mxu0 0.0
        %1188 = vmatprep.subr.mxu0 0.0
        %1189 = vmatpush1.msra.mxu0 0.0
        %1190 = vmatprep.subr.mxu0 0.0
        %1191 = vmatpush1.msra.mxu0 0.0
        %1192 = vmatprep.subr.mxu0 0.0
        %1193 = vmatpush1.msra.mxu0 0.0
        %1194 = vmatprep.subr.mxu0 0.0
        %1195 = vmatpush1.msra.mxu0 0.0
        %1196 = vmatprep.subr.mxu0 0.0
        %1197 = vmatpush1.msra.mxu0 0.0
        %1198 = vmatprep.subr.mxu0 0.0
        %1199 = vmatpush1.msra.mxu0 0.0
        %1200 = vmatprep.subr.mxu0 0.0
        %1201 = vmatpush1.msra.mxu0 0.0
        %1202 = vmatprep.subr.mxu0 0.0
        %1203 = vmatpush1.msra.mxu0 0.0
        %1204 = vmatprep.subr.mxu0 0.0
        %1205 = vmatpush1.msra.mxu0 0.0
        %1206 = vmatprep.subr.mxu0 0.0
        %1207 = vmatpush1.msra.mxu0 0.0
        %1208 = vmatprep.subr.mxu0 0.0
        %1209 = vmatpush1.msra.mxu0 0.0
        %1210 = vmatprep.mubr.f32.mxu0 0.0
        %1211 = vmatmul.mubr.f32.gmra.mrb[0].mxu0 %v1099
        %v1212 = vpop.f32.mrb[0].mxu0
        %v1213 = vadd.f32 0.0, %v1212
        %v1214 = vpop.f32.mrb[0].mxu0
        %1215 = vmatprep.mubr.f32.mxu0 0.0
        %1216 = vmatmul.mubr.f32.gmra.mrb[0].mxu0 %v1102
        %v1217 = vpop.f32.mrb[0].mxu0
        %v1218 = vadd.f32 0.0, %v1217
        %v1219 = vpop.f32.mrb[0].mxu0
        %1220 = vmatprep.mubr.f32.mxu0 0.0
        %1221 = vmatmul.mubr.f32.gmra.mrb[0].mxu0 %v1105
        %v1222 = vpop.f32.mrb[0].mxu0
        %v1223 = vadd.f32 0.0, %v1222
        %v1224 = vpop.f32.mrb[0].mxu0
        %1225 = vmatprep.mubr.f32.mxu0 0.0
        %1226 = vmatmul.mubr.f32.gmra.mrb[0].mxu0 %v1108
        %v1227 = vpop.f32.mrb[0].mxu0
        %v1228 = vadd.f32 0.0, %v1227
        %v1229 = vpop.f32.mrb[0].mxu0
        %1230 = vmatprep.mubr.f32.mxu0 0.0
        %1231 = vmatmul.mubr.f32.gmra.mrb[0].mxu0 %v1111
        %v1232 = vpop.f32.mrb[0].mxu0
        %v1233 = vadd.f32 0.0, %v1232
        %v1234 = vpop.f32.mrb[0].mxu0
        %1235 = vmatprep.mubr.f32.mxu0 0.0
        %1236 = vmatmul.mubr.f32.gmra.mrb[0].mxu0 %v1114
        %v1237 = vpop.f32.mrb[0].mxu0
        %v1238 = vadd.f32 0.0, %v1237
        %v1239 = vpop.f32.mrb[0].mxu0
        %1240 = vmatprep.mubr.f32.mxu0 0.0
        %1241 = vmatmul.mubr.f32.gmra.mrb[0].mxu0 %v1117
        %v1242 = vpop.f32.mrb[0].mxu0
        %v1243 = vadd.f32 0.0, %v1242
        %v1244 = vpop.f32.mrb[0].mxu0
        %1245 = vmatprep.mubr.f32.mxu0 0.0
        %1246 = vmatmul.mubr.f32.gmra.mrb[0].mxu0 %v1120
        %v1247 = vpop.f32.mrb[0].mxu0
        %v1248 = vadd.f32 0.0, %v1247
        %v1249 = vpop.f32.mrb[0].mxu0
        %1250 = vmatprep.mubr.f32.mxu0 0.0
        %1251 = vmatmul.mubr.f32.gmra.mrb[0].mxu0 %v1123
        %v1252 = vpop.f32.mrb[0].mxu0
        %v1253 = vadd.f32 0.0, %v1252
        %v1254 = vpop.f32.mrb[0].mxu0
        %1255 = vmatprep.mubr.f32.mxu0 0.0
        %1256 = vmatmul.mubr.f32.gmra.mrb[0].mxu0 %v1126
        %v1257 = vpop.f32.mrb[0].mxu0
        %v1258 = vadd.f32 0.0, %v1257
        %v1259 = vpop.f32.mrb[0].mxu0
        %1260 = vmatprep.mubr.f32.mxu0 0.0
        %1261 = vmatmul.mubr.f32.gmra.mrb[0].mxu0 %v1129
        %v1262 = vpop.f32.mrb[0].mxu0
        %v1263 = vadd.f32 0.0, %v1262
        %v1264 = vpop.f32.mrb[0].mxu0
        %1265 = vmatprep.mubr.f32.mxu0 0.0
        %1266 = vmatmul.mubr.f32.gmra.mrb[0].mxu0 %v1132
        %v1267 = vpop.f32.mrb[0].mxu0
        %v1268 = vadd.f32 0.0, %v1267
        %v1269 = vpop.f32.mrb[0].mxu0
        %1270 = vmatprep.mubr.f32.mxu0 0.0
        %1271 = vmatmul.mubr.f32.gmra.mrb[0].mxu0 %v1135
        %v1272 = vpop.f32.mrb[0].mxu0
        %v1273 = vadd.f32 0.0, %v1272
        %v1274 = vpop.f32.mrb[0].mxu0
        %1275 = vmatprep.mubr.f32.mxu0 0.0
        %1276 = vmatmul.mubr.f32.gmra.mrb[0].mxu0 %v1138
        %v1277 = vpop.f32.mrb[0].mxu0
        %v1278 = vadd.f32 0.0, %v1277
        %v1279 = vpop.f32.mrb[0].mxu0
        %1280 = vmatprep.mubr.f32.mxu0 0.0
        %1281 = vmatmul.mubr.f32.gmra.mrb[0].mxu0 %v1141
        %v1282 = vpop.f32.mrb[0].mxu0
        %v1283 = vadd.f32 0.0, %v1282
        %v1284 = vpop.f32.mrb[0].mxu0
        %1285 = vmatprep.mubr.f32.mxu0 0.0
        %1286 = vmatmul.mubr.f32.gmra.mrb[0].mxu0 %v1144
        %v1287 = vpop.f32.mrb[0].mxu0
        %v1288 = vadd.f32 0.0, %v1287
        %v1289 = vpop.f32.mrb[0].mxu0
        %1290 = vdwg.mxu0
        %v1291 = vadd.f32 %v1065, %v1213
        %v1292 = vadd.f32 %v1066, %v1218
        %v1293 = vadd.f32 %v1067, %v1223
        %v1294 = vadd.f32 %v1068, %v1228
        %v1295 = vadd.f32 %v1069, %v1233
        %v1296 = vadd.f32 %v1070, %v1238
        %v1297 = vadd.f32 %v1071, %v1243
        %v1298 = vadd.f32 %v1072, %v1248
        %v1299 = vadd.f32 %v1073, %v1253
        %v1300 = vadd.f32 %v1074, %v1258
        %v1301 = vadd.f32 %v1075, %v1263
        %v1302 = vadd.f32 %v1076, %v1268
        %v1303 = vadd.f32 %v1077, %v1273
        %v1304 = vadd.f32 %v1078, %v1278
        %v1305 = vadd.f32 %v1079, %v1283
        %v1306 = vadd.f32 %v1080, %v1288
        %vm1307 = vcmask 31744
        %1308 = vst.msk [vmem:[#allocation2] sm:$0xff] %vm1307, %v1291
        %1309 = vst.msk [vmem:[#allocation2 + $0x8] sm:$0xff] %vm1307, %v1292
        %1310 = vst.msk [vmem:[#allocation2 + $0x10] sm:$0xff] %vm1307, %v1293
        %1311 = vst.msk [vmem:[#allocation2 + $0x18] sm:$0xff] %vm1307, %v1294
        %1312 = vst.msk [vmem:[#allocation2 + $0x20] sm:$0xff] %vm1307, %v1295
        %1313 = vst.msk [vmem:[#allocation2 + $0x28] sm:$0xff] %vm1307, %v1296
        %1314 = vst.msk [vmem:[#allocation2 + $0x30] sm:$0xff] %vm1307, %v1297
        %1315 = vst.msk [vmem:[#allocation2 + $0x38] sm:$0xff] %vm1307, %v1298
        %1316 = vst.msk [vmem:[#allocation2 + $0x40] sm:$0xff] %vm1307, %v1299
        %1317 = vst.msk [vmem:[#allocation2 + $0x48] sm:$0xff] %vm1307, %v1300
        %1318 = vst.msk [vmem:[#allocation2 + $0x50] sm:$0xff] %vm1307, %v1301
        %1319 = vst.msk [vmem:[#allocation2 + $0x58] sm:$0xff] %vm1307, %v1302
        %1320 = vst.msk [vmem:[#allocation2 + $0x60] sm:$0xff] %vm1307, %v1303
        %1321 = vst.msk [vmem:[#allocation2 + $0x68] sm:$0xff] %vm1307, %v1304
        %1322 = vst.msk [vmem:[#allocation2 + $0x70] sm:$0xff] %vm1307, %v1305
        %1323 = vst.msk [vmem:[#allocation2 + $0x78] sm:$0xff] %vm1307, %v1306
        // Predicated region
        $region49: #{tpu_custom_call.1} parent=43 // pred_check
          %p1324 = pneg %p320
        $region50: #{tpu_custom_call.1} parent=43 // pred_check_branch
          %1326 = sbr.rel (%p1324) target = $region52
        $region51: #{tpu_custom_call.1} parent=43 // pred_region
          %v1327 = vld [vmem:[#allocation2] sm:$0xff]
          %v1328 = vld [vmem:[#allocation2 + $0x8] sm:$0xff]
          %v1329 = vld [vmem:[#allocation2 + $0x10] sm:$0xff]
          %v1330 = vld [vmem:[#allocation2 + $0x18] sm:$0xff]
          %v1331 = vld [vmem:[#allocation2 + $0x20] sm:$0xff]
          %v1332 = vld [vmem:[#allocation2 + $0x28] sm:$0xff]
          %v1333 = vld [vmem:[#allocation2 + $0x30] sm:$0xff]
          %v1334 = vld [vmem:[#allocation2 + $0x38] sm:$0xff]
          %v1335 = vld [vmem:[#allocation2 + $0x40] sm:$0xff]
          %v1336 = vld [vmem:[#allocation2 + $0x48] sm:$0xff]
          %v1337 = vld [vmem:[#allocation2 + $0x50] sm:$0xff]
          %v1338 = vld [vmem:[#allocation2 + $0x58] sm:$0xff]
          %v1339 = vld [vmem:[#allocation2 + $0x60] sm:$0xff]
          %v1340 = vld [vmem:[#allocation2 + $0x68] sm:$0xff]
          %v1341 = vld [vmem:[#allocation2 + $0x70] sm:$0xff]
          %v1342 = vld [vmem:[#allocation2 + $0x78] sm:$0xff]
          %v1343 = vld [vmem:[%s3] sm:$0xff]
          %v1344 = vld [vmem:[%s3 + $0x8] sm:$0xff]
          %v1345 = vld [vmem:[%s3 + $0x10] sm:$0xff]
          %v1346 = vld [vmem:[%s3 + $0x18] sm:$0xff]
          %v1347 = vld [vmem:[%s3 + $0x20] sm:$0xff]
          %v1348 = vld [vmem:[%s3 + $0x28] sm:$0xff]
          %v1349 = vld [vmem:[%s3 + $0x30] sm:$0xff]
          %v1350 = vld [vmem:[%s3 + $0x38] sm:$0xff]
          %v1351 = vld [vmem:[%s3 + $0x40] sm:$0xff]
          %v1352 = vld [vmem:[%s3 + $0x48] sm:$0xff]
          %v1353 = vld [vmem:[%s3 + $0x50] sm:$0xff]
          %v1354 = vld [vmem:[%s3 + $0x58] sm:$0xff]
          %v1355 = vld [vmem:[%s3 + $0x60] sm:$0xff]
          %v1356 = vld [vmem:[%s3 + $0x68] sm:$0xff]
          %v1357 = vld [vmem:[%s3 + $0x70] sm:$0xff]
          %v1358 = vld [vmem:[%s3 + $0x78] sm:$0xff]
          %1360 = vset.pattern.permute.xlu0 0
          %1361 = vperm.xlu0 %1360, %v1343
          %v1362 = vpop.permute.xlu0 %1361
          %1365 = vset.pattern.permute.xlu0 0
          %1366 = vperm.xlu0 %1365, %v1344
          %v1367 = vpop.permute.xlu0 %1366
          %1370 = vset.pattern.permute.xlu0 0
          %1371 = vperm.xlu0 %1370, %v1345
          %v1372 = vpop.permute.xlu0 %1371
          %1375 = vset.pattern.permute.xlu0 0
          %1376 = vperm.xlu0 %1375, %v1346
          %v1377 = vpop.permute.xlu0 %1376
          %1380 = vset.pattern.permute.xlu0 0
          %1381 = vperm.xlu0 %1380, %v1347
          %v1382 = vpop.permute.xlu0 %1381
          %1385 = vset.pattern.permute.xlu0 0
          %1386 = vperm.xlu0 %1385, %v1348
          %v1387 = vpop.permute.xlu0 %1386
          %1390 = vset.pattern.permute.xlu0 0
          %1391 = vperm.xlu0 %1390, %v1349
          %v1392 = vpop.permute.xlu0 %1391
          %1395 = vset.pattern.permute.xlu0 0
          %1396 = vperm.xlu0 %1395, %v1350
          %v1397 = vpop.permute.xlu0 %1396
          %1400 = vset.pattern.permute.xlu0 0
          %1401 = vperm.xlu0 %1400, %v1351
          %v1402 = vpop.permute.xlu0 %1401
          %1405 = vset.pattern.permute.xlu0 0
          %1406 = vperm.xlu0 %1405, %v1352
          %v1407 = vpop.permute.xlu0 %1406
          %1410 = vset.pattern.permute.xlu0 0
          %1411 = vperm.xlu0 %1410, %v1353
          %v1412 = vpop.permute.xlu0 %1411
          %1415 = vset.pattern.permute.xlu0 0
          %1416 = vperm.xlu0 %1415, %v1354
          %v1417 = vpop.permute.xlu0 %1416
          %1420 = vset.pattern.permute.xlu0 0
          %1421 = vperm.xlu0 %1420, %v1355
          %v1422 = vpop.permute.xlu0 %1421
          %1425 = vset.pattern.permute.xlu0 0
          %1426 = vperm.xlu0 %1425, %v1356
          %v1427 = vpop.permute.xlu0 %1426
          %1430 = vset.pattern.permute.xlu0 0
          %1431 = vperm.xlu0 %1430, %v1357
          %v1432 = vpop.permute.xlu0 %1431
          %1435 = vset.pattern.permute.xlu0 0
          %1436 = vperm.xlu0 %1435, %v1358
          %v1437 = vpop.permute.xlu0 %1436
          %v1439 = vadd.f32 %v1327, %v1362
          %v1440 = vadd.f32 %v1328, %v1367
          %v1441 = vadd.f32 %v1329, %v1372
          %v1442 = vadd.f32 %v1330, %v1377
          %v1443 = vadd.f32 %v1331, %v1382
          %v1444 = vadd.f32 %v1332, %v1387
          %v1445 = vadd.f32 %v1333, %v1392
          %v1446 = vadd.f32 %v1334, %v1397
          %v1447 = vadd.f32 %v1335, %v1402
          %v1448 = vadd.f32 %v1336, %v1407
          %v1449 = vadd.f32 %v1337, %v1412
          %v1450 = vadd.f32 %v1338, %v1417
          %v1451 = vadd.f32 %v1339, %v1422
          %v1452 = vadd.f32 %v1340, %v1427
          %v1453 = vadd.f32 %v1341, %v1432
          %v1454 = vadd.f32 %v1342, %v1437
          %v1455 = vmax.f32 %v1439, 0.0
          %v1456 = vmax.f32 %v1440, 0.0
          %v1457 = vmax.f32 %v1441, 0.0
          %v1458 = vmax.f32 %v1442, 0.0
          %v1459 = vmax.f32 %v1443, 0.0
          %v1460 = vmax.f32 %v1444, 0.0
          %v1461 = vmax.f32 %v1445, 0.0
          %v1462 = vmax.f32 %v1446, 0.0
          %v1463 = vmax.f32 %v1447, 0.0
          %v1464 = vmax.f32 %v1448, 0.0
          %v1465 = vmax.f32 %v1449, 0.0
          %v1466 = vmax.f32 %v1450, 0.0
          %v1467 = vmax.f32 %v1451, 0.0
          %v1468 = vmax.f32 %v1452, 0.0
          %v1469 = vmax.f32 %v1453, 0.0
          %v1470 = vmax.f32 %v1454, 0.0
          %v1471 = vld [vmem:[%s4] sm:$0xff]
          %v1472 = vld [vmem:[%s4 + $0x8] sm:$0xff]
          %v1473 = vld [vmem:[%s4 + $0x10] sm:$0xff]
          %v1474 = vld [vmem:[%s4 + $0x18] sm:$0xff]
          %v1475 = vld [vmem:[%s4 + $0x20] sm:$0xff]
          %v1476 = vld [vmem:[%s4 + $0x28] sm:$0xff]
          %v1477 = vld [vmem:[%s4 + $0x30] sm:$0xff]
          %v1478 = vld [vmem:[%s4 + $0x38] sm:$0xff]
          %v1479 = vld [vmem:[%s4 + $0x40] sm:$0xff]
          %v1480 = vld [vmem:[%s4 + $0x48] sm:$0xff]
          %v1481 = vld [vmem:[%s4 + $0x50] sm:$0xff]
          %v1482 = vld [vmem:[%s4 + $0x58] sm:$0xff]
          %v1483 = vld [vmem:[%s4 + $0x60] sm:$0xff]
          %v1484 = vld [vmem:[%s4 + $0x68] sm:$0xff]
          %v1485 = vld [vmem:[%s4 + $0x70] sm:$0xff]
          %v1486 = vld [vmem:[%s4 + $0x78] sm:$0xff]
          %1488 = vset.pattern.permute.xlu0 0
          %1489 = vperm.xlu0 %1488, %v1471
          %v1490 = vpop.permute.xlu0 %1489
          %1493 = vset.pattern.permute.xlu0 0
          %1494 = vperm.xlu0 %1493, %v1472
          %v1495 = vpop.permute.xlu0 %1494
          %1498 = vset.pattern.permute.xlu0 0
          %1499 = vperm.xlu0 %1498, %v1473
          %v1500 = vpop.permute.xlu0 %1499
          %1503 = vset.pattern.permute.xlu0 0
          %1504 = vperm.xlu0 %1503, %v1474
          %v1505 = vpop.permute.xlu0 %1504
          %1508 = vset.pattern.permute.xlu0 0
          %1509 = vperm.xlu0 %1508, %v1475
          %v1510 = vpop.permute.xlu0 %1509
          %1513 = vset.pattern.permute.xlu0 0
          %1514 = vperm.xlu0 %1513, %v1476
          %v1515 = vpop.permute.xlu0 %1514
          %1518 = vset.pattern.permute.xlu0 0
          %1519 = vperm.xlu0 %1518, %v1477
          %v1520 = vpop.permute.xlu0 %1519
          %1523 = vset.pattern.permute.xlu0 0
          %1524 = vperm.xlu0 %1523, %v1478
          %v1525 = vpop.permute.xlu0 %1524
          %1528 = vset.pattern.permute.xlu0 0
          %1529 = vperm.xlu0 %1528, %v1479
          %v1530 = vpop.permute.xlu0 %1529
          %1533 = vset.pattern.permute.xlu0 0
          %1534 = vperm.xlu0 %1533, %v1480
          %v1535 = vpop.permute.xlu0 %1534
          %1538 = vset.pattern.permute.xlu0 0
          %1539 = vperm.xlu0 %1538, %v1481
          %v1540 = vpop.permute.xlu0 %1539
          %1543 = vset.pattern.permute.xlu0 0
          %1544 = vperm.xlu0 %1543, %v1482
          %v1545 = vpop.permute.xlu0 %1544
          %1548 = vset.pattern.permute.xlu0 0
          %1549 = vperm.xlu0 %1548, %v1483
          %v1550 = vpop.permute.xlu0 %1549
          %1553 = vset.pattern.permute.xlu0 0
          %1554 = vperm.xlu0 %1553, %v1484
          %v1555 = vpop.permute.xlu0 %1554
          %1558 = vset.pattern.permute.xlu0 0
          %1559 = vperm.xlu0 %1558, %v1485
          %v1560 = vpop.permute.xlu0 %1559
          %1563 = vset.pattern.permute.xlu0 0
          %1564 = vperm.xlu0 %1563, %v1486
          %v1565 = vpop.permute.xlu0 %1564
          %v1567 = vmul.f32 %v1455, %v1490
          %v1568 = vmul.f32 %v1456, %v1495
          %v1569 = vmul.f32 %v1457, %v1500
          %v1570 = vmul.f32 %v1458, %v1505
          %v1571 = vmul.f32 %v1459, %v1510
          %v1572 = vmul.f32 %v1460, %v1515
          %v1573 = vmul.f32 %v1461, %v1520
          %v1574 = vmul.f32 %v1462, %v1525
          %v1575 = vmul.f32 %v1463, %v1530
          %v1576 = vmul.f32 %v1464, %v1535
          %v1577 = vmul.f32 %v1465, %v1540
          %v1578 = vmul.f32 %v1466, %v1545
          %v1579 = vmul.f32 %v1467, %v1550
          %v1580 = vmul.f32 %v1468, %v1555
          %v1581 = vmul.f32 %v1469, %v1560
          %v1582 = vmul.f32 %v1470, %v1565
          %v1583 = vsel %vm1307, %v1567, 0.0
          %v1584 = vsel %vm1307, %v1568, 0.0
          %v1585 = vadd.f32 %v1583, %v1584
          %v1586 = vsel %vm1307, %v1569, 0.0
          %v1587 = vadd.f32 %v1585, %v1586
          %v1588 = vsel %vm1307, %v1570, 0.0
          %v1589 = vadd.f32 %v1587, %v1588
          %v1590 = vsel %vm1307, %v1571, 0.0
          %v1591 = vadd.f32 %v1589, %v1590
          %v1592 = vsel %vm1307, %v1572, 0.0
          %v1593 = vadd.f32 %v1591, %v1592
          %v1594 = vsel %vm1307, %v1573, 0.0
          %v1595 = vadd.f32 %v1593, %v1594
          %v1596 = vsel %vm1307, %v1574, 0.0
          %v1597 = vadd.f32 %v1595, %v1596
          %v1598 = vsel %vm1307, %v1575, 0.0
          %v1599 = vadd.f32 %v1597, %v1598
          %v1600 = vsel %vm1307, %v1576, 0.0
          %v1601 = vadd.f32 %v1599, %v1600
          %v1602 = vsel %vm1307, %v1577, 0.0
          %v1603 = vadd.f32 %v1601, %v1602
          %v1604 = vsel %vm1307, %v1578, 0.0
          %v1605 = vadd.f32 %v1603, %v1604
          %v1606 = vsel %vm1307, %v1579, 0.0
          %v1607 = vadd.f32 %v1605, %v1606
          %v1608 = vsel %vm1307, %v1580, 0.0
          %v1609 = vadd.f32 %v1607, %v1608
          %v1610 = vsel %vm1307, %v1581, 0.0
          %v1611 = vadd.f32 %v1609, %v1610
          %v1612 = vsel %vm1307, %v1582, 0.0
          %v1613 = vadd.f32 %v1611, %v1612
          %v1614 = vrot.slane %v1613, 4
          %v1615 = vadd.f32 %v1613, %v1614
          %v1616 = vrot.slane %v1615, 2
          %v1617 = vadd.f32 %v1615, %v1616
          %v1618 = vrot.slane %v1617, 1
          %v1619 = vadd.f32 %v1617, %v1618
          %v1620 = vld [vmem:[#allocation3] sm:$0x1]
          %1622 = vset.pattern.permute.xlu0 0
          %1623 = vperm.xlu0 %1622, %v1620
          %v1624 = vpop.permute.xlu0 %1623
          %v1626 = vlaneseq
          %v1627 = vshrl.u32 %v1626, 7
          %v1628 = vsub.s32 0, %v1627
          %v1629 = vrot.slane %v1624, %v1628
          %v1630 = vadd.f32 %v1619, %v1629
          %v1631 = vsub.f32 0.0, %v1630
          %v1632 = vmul.f32 %v1631, 1.442695
          %v1633 = vpow.pop %v1632
          %v1634 = vadd.f32 %v1633, 1.0
          %v1635 = vrcp.pop %v1634
          %v1636 = vmul.f32 1.0, %v1635
          %vm1637 = vcmask 24576
          %1638 = vst.msk [vmem:[%s298] sm:$0x1] %vm1637, %v1636
        $region52: #{tpu_custom_call.1} parent=43 // pred_fallthru
          _
        %s1639 = sand.u32 %s185, 1
        %s1640 = scalar_lea.sflag [#allocation5], %s1639
        %s1641 = sand.u32 %s185, 1
        %s1642 = scalar_lea.vmem [#allocation4], %s1641
        // Predicated region
        $region53: #{tpu_custom_call.1} parent=43 // pred_check
          %p1643 = pneg %p195
        $region54: #{tpu_custom_call.1} parent=43 // pred_check_branch
          %1645 = sbr.rel (%p1643) target = $region56
        $region55: #{tpu_custom_call.1} parent=43 // pred_region
          %s1647 = ssub.s32 16, 16
          %1648 = vsyncadd %s1640, %s1647
          %s1649 = smul.addr %s26, 16
          %s1650 = scalar_lea.hbm %s6, %s1649
          %s1652 = sshll.u32 %s1642, 4
          %s1653 = int_to_ptr.vmem [resolvable:$true] %s1652
          %1655 = dma.vmem_to_hbm [thread:$0]  %s1653, 16, %s1650, %s1640
        $region56: #{tpu_custom_call.1} parent=43 // pred_fallthru
          _
      $region44: #{tpu_custom_call.1} parent=5 // pred_fallthru
        _
      %p1656 = scmp.le.s32.totalorder 2, %s17
      // Predicated region
      $region57: #{tpu_custom_call.1} parent=5 // pred_check
        %p1657 = pneg %p1656
      $region58: #{tpu_custom_call.1} parent=5 // pred_check_branch
        %1659 = sbr.rel (%p1657) target = $region60
      $region59: #{tpu_custom_call.1} parent=5 // pred_region
        %s1660 = ssub.s32 %s17, 2
        // Predicated region
        $region61: #{tpu_custom_call.1} parent=59 // pred_check
          %p1661 = pneg %p201
        $region62: #{tpu_custom_call.1} parent=59 // pred_check_branch
          %1663 = sbr.rel (%p1661) target = $region64
        $region63: #{tpu_custom_call.1} parent=59 // pred_region
          %s1664 = sand.u32 %s186, 1
          %s1665 = scalar_lea.sflag [#allocation5], %s1664
          %s1666 = sand.u32 %s186, 1
          %s1667 = scalar_lea.vmem [#allocation4], %s1666
          %1668 = dma.done %s1665, 16
        $region64: #{tpu_custom_call.1} parent=59 // pred_fallthru
          _
      $region60: #{tpu_custom_call.1} parent=5 // pred_fallthru
        _
    $region6: #{tpu_custom_call.1} parent=1 // loop_footer
      %s21 = sadd.s32 1, %s17
    $region7: #{tpu_custom_call.1} parent=1 // loop_footer_branch
      %16 = sbr.rel target = $region3
    $region8: #{tpu_custom_call.1} parent=1 // loop_exit
      _
    %1669 = vsyncpa [#allocation5], 1
    %s1670 = scalar_lea.sflag [#allocation5], 1
    %1671 = vsyncpa %s1670, 1

</llo_original>
